<compile_context>
chip_gen: v6e
topology: v6e:2x2x1
jax: 0.10.0
libtpu: 0.0.40
codegen_flags: <defaults>
</compile_context>

<pallas_src>
import numpy as np
import jax
import jax.numpy as jnp
from jax.experimental import pallas as pl
from jax.experimental.pallas import tpu as pltpu


def _bilinear_matrix(in_size: int, out_size: int) -> np.ndarray:
    """Interpolation matrix M (out_size, in_size) replicating PyTorch bilinear
    upsampling with align_corners=False (half-pixel centers, src clamped >= 0)."""
    i = np.arange(out_size, dtype=np.float64)
    src = (i + 0.5) * (in_size / out_size) - 0.5
    src = np.maximum(src, 0.0)
    i0 = np.minimum(np.floor(src).astype(np.int64), in_size - 1)
    i1 = np.minimum(i0 + 1, in_size - 1)
    lam = src - i0
    M = np.zeros((out_size, in_size), dtype=np.float64)
    M[np.arange(out_size), i0] += 1.0 - lam
    M[np.arange(out_size), i1] += lam
    return M.astype(np.float32)


def _upsample_kernel(x_ref, w_ref, b_ref, uh_ref, uwT_ref, o_ref):
    # x_ref  : (1, C_in, H*W)   lane-dense conv input (bf16)
    # w_ref  : (CB, C_in)  f32  1x1 conv weight with BN scale folded in
    # b_ref  : (CB, 1)     f32  folded BN bias
    # uh_ref : (2H, H)     f32  row (H) interpolation matrix
    # uwT_ref: (W, 2W)     f32  column (W) interpolation matrix, transposed
    # o_ref  : (1, CB, 2H, 2W)
    xf = x_ref[0]                                       # (C_in, H*W)
    w = w_ref[...].astype(xf.dtype)                     # bf16 MXU operand

    # --- 1x1 conv as a channel matmul, lane-dense over H*W (MXU, f32 acc) ---
    y = jnp.dot(w, xf, preferred_element_type=jnp.float32)        # (CB, H*W)

    # --- folded BN bias + SiLU, still lane-dense (VPU + EUP) ---
    y = y + b_ref[...]
    y = y * jax.nn.sigmoid(y)

    cb = y.shape[0]
    w_in, w_out = uwT_ref.shape
    h_out, h_in = uh_ref.shape
    y3 = y.reshape(cb, h_in, w_in)                      # (CB, H, W)

    # --- W-direction upsample: contract the lane (W) axis against (W, 2W) ---
    t = jax.lax.dot_general(y3, uwT_ref[...],
                            (((2,), (0,)), ((), ())),
                            preferred_element_type=jnp.float32)   # (CB, H, 2W)

    # --- H-direction upsample as a channel-batched contraction so the result
    #     lands directly in (CB, 2H, 2W) order: no output transpose/relayout ---
    uh_b = jnp.broadcast_to(uh_ref[...][None, :, :], (cb, h_out, h_in))
    out = jax.lax.dot_general(uh_b, t,
                              (((2,), (1,)), ((0,), (0,))),
                              preferred_element_type=jnp.float32)  # (CB, 2H, 2W)
    o_ref[0] = out.astype(o_ref.dtype)


def upsample_forward(x, conv_w, bn_gamma, bn_beta, bn_mean, bn_var,
                     scale_factor: int = 2, eps: float = 1e-5,
                     c_block: int | None = None,
                     matmul_dtype=jnp.bfloat16):
    """x: (N, C_in, H, W) f32. conv_w: (C_out, C_in, 1, 1) f32."""
    N, C_in, H, W = x.shape
    C_out = conv_w.shape[0]
    Ho, Wo = H * scale_factor, W * scale_factor

    if c_block is None:
        c_block = C_out if C_out <= 128 else 128
    if C_out % c_block != 0:
        raise ValueError("c_block must divide C_out")
    if c_block != C_out and c_block % 8 != 0:
        raise ValueError("c_block must be a multiple of 8 (sublane tiling)")

    # Fold inference-mode BN into the conv weight (scale) and a bias.
    bn_scale = bn_gamma / jnp.sqrt(bn_var + eps)                   # (C_out,)
    bn_bias = (bn_beta - bn_mean * bn_scale).reshape(C_out, 1)     # (C_out, 1)
    w_folded = conv_w.reshape(C_out, C_in) * bn_scale[:, None]     # (C_out, C_in)

    uh = jnp.asarray(_bilinear_matrix(H, Ho))                      # (2H, H)
    uwT = jnp.asarray(_bilinear_matrix(W, Wo)).T                   # (W, 2W)

    # Lane-dense conv input; bf16 halves the input DMA and feeds the MXU at peak.
    x_flat = x.reshape(N, C_in, H * W).astype(matmul_dtype)

    grid = (N, C_out // c_block)
    out = pl.pallas_call(
        _upsample_kernel,
        out_shape=jax.ShapeDtypeStruct((N, C_out, Ho, Wo), x.dtype),
        grid_spec=pltpu.PrefetchScalarGridSpec(
            num_scalar_prefetch=0,
            grid=grid,
            in_specs=[
                pl.BlockSpec((1, C_in, H * W), lambda n, c: (n, 0, 0)),
                pl.BlockSpec((c_block, C_in), lambda n, c: (c, 0)),
                pl.BlockSpec((c_block, 1), lambda n, c: (c, 0)),
                pl.BlockSpec((Ho, H), lambda n, c: (0, 0)),
                pl.BlockSpec((W, Wo), lambda n, c: (0, 0)),
            ],
            out_specs=pl.BlockSpec((1, c_block, Ho, Wo),
                                   lambda n, c: (n, c, 0, 0)),
        ),
        compiler_params=pltpu.CompilerParams(
            dimension_semantics=("parallel", "parallel"),
            vmem_limit_bytes=48 * 1024 * 1024,   # headroom below v7x 64 MiB
        ),
    )(x_flat, w_folded, bn_bias, uh, uwT)
    return out


def _reference(x, conv_w, bn_gamma, bn_beta, bn_mean, bn_var,
               scale_factor=2, eps=1e-5, matmul_dtype=jnp.bfloat16):
    """Pure-JAX reference mirroring the kernel's bf16 operand rounding."""
    N, C_in, H, W = x.shape
    C_out = conv_w.shape[0]
    bn_scale = bn_gamma / jnp.sqrt(bn_var + eps)
    bn_bias = (bn_beta - bn_mean * bn_scale).reshape(1, C_out, 1, 1)
    w_folded = conv_w.reshape(C_out, C_in) * bn_scale[:, None]
    xr = x.astype(matmul_dtype).astype(jnp.float32)
    wr = w_folded.astype(matmul_dtype).astype(jnp.float32)
    y = jnp.einsum('oc,nchw->nohw', wr, xr,
                   precision=jax.lax.Precision.HIGHEST) + bn_bias
    y = y * jax.nn.sigmoid(y)
    uh = jnp.asarray(_bilinear_matrix(H, H * scale_factor))
    uw = jnp.asarray(_bilinear_matrix(W, W * scale_factor))
    return jnp.einsum('ph,nchw,qw->ncpq', uh, y, uw,
                      precision=jax.lax.Precision.HIGHEST)


if __name__ == "__main__":
    key = jax.random.PRNGKey(0)
    k_x, k_w, k_g, k_b, k_m, k_v = jax.random.split(key, 6)

    N, C_in, C_out, H, W = 2, 4, 16, 16, 16   # C_out=16 with c_block=8 exercises
                                              # the channel grid axis.

    x = jax.random.normal(k_x, (N, C_in, H, W), dtype=jnp.float32)
    conv_w = jax.random.normal(k_w, (C_out, C_in, 1, 1), dtype=jnp.float32) * 0.2
    bn_gamma = 1.0 + 0.1 * jax.random.normal(k_g, (C_out,), dtype=jnp.float32)
    bn_beta = 0.1 * jax.random.normal(k_b, (C_out,), dtype=jnp.float32)
    bn_mean = 0.1 * jax.random.normal(k_m, (C_out,), dtype=jnp.float32)
    bn_var = 0.5 + jnp.abs(jax.random.normal(k_v, (C_out,), dtype=jnp.float32))

    out = upsample_forward(x, conv_w, bn_gamma, bn_beta, bn_mean, bn_var,
                           c_block=8)
    out = jax.block_until_ready(out)

    ref = _reference(x, conv_w, bn_gamma, bn_beta, bn_mean, bn_var)
    assert out.shape == (N, C_out, 2 * H, 2 * W), out.shape
    np.testing.assert_allclose(np.asarray(out), np.asarray(ref),
                               rtol=5e-4, atol=5e-4)

    print("KERNEL_OK")
</pallas_src>

<mosaic_0001>
module attributes {stable_mosaic.version = 11 : i64} {
  func.func @_upsample_kernel(%arg0: i32, %arg1: i32, %arg2: memref<1x4x256xbf16, #tpu.memory_space<vmem>>, %arg3: memref<8x4xf32, #tpu.memory_space<vmem>>, %arg4: memref<8x1xf32, #tpu.memory_space<vmem>>, %arg5: memref<32x16xf32, #tpu.memory_space<vmem>>, %arg6: memref<16x32xf32, #tpu.memory_space<vmem>>, %arg7: memref<1x8x32x32xf32, #tpu.memory_space<vmem>>) attributes {dimension_semantics = [#tpu.dimension_semantics<parallel>, #tpu.dimension_semantics<parallel>], iteration_bounds = array<i64: 2, 2>, scalar_prefetch = 0 : i64, scratch_operands = 0 : i64, tpu.core_type = #tpu.core_type<tc>, window_params = [{transform_indices = @transform_0, window_bounds = array<i64: 1, 4, 256>}, {transform_indices = @transform_1, window_bounds = array<i64: 8, 4>}, {transform_indices = @transform_2, window_bounds = array<i64: 8, 1>}, {pipeline_mode = #tpu.pipeline_mode<synchronous>, transform_indices = @transform_3, window_bounds = array<i64: 32, 16>}, {pipeline_mode = #tpu.pipeline_mode<synchronous>, transform_indices = @transform_4, window_bounds = array<i64: 16, 32>}, {transform_indices = @transform_5, window_bounds = array<i64: 1, 8, 32, 32>}]} {
    %c0 = arith.constant 0 : index
    %c0_0 = arith.constant 0 : index
    %c0_1 = arith.constant 0 : index
    %0 = vector.load %arg2[%c0, %c0_0, %c0_1] : memref<1x4x256xbf16, #tpu.memory_space<vmem>>, vector<1x4x256xbf16>
    %1 = vector.shape_cast %0 : vector<1x4x256xbf16> to vector<4x256xbf16>
    %c0_2 = arith.constant 0 : index
    %c0_3 = arith.constant 0 : index
    %2 = vector.load %arg3[%c0_2, %c0_3] : memref<8x4xf32, #tpu.memory_space<vmem>>, vector<8x4xf32>
    %3 = arith.truncf %2 : vector<8x4xf32> to vector<8x4xbf16>
    %cst = arith.constant dense<0.000000e+00> : vector<8x256xf32>
    %4 = tpu.matmul %3, %1, %cst {dimension_numbers = #tpu.dot_dimension_numbers<[1], [0], [0], [1], [0, 0, 1, 1], [], []>} : vector<8x4xbf16>, vector<4x256xbf16>, vector<8x256xf32> -> vector<8x256xf32>
    %c0_4 = arith.constant 0 : index
    %c0_5 = arith.constant 0 : index
    %5 = vector.load %arg4[%c0_4, %c0_5] : memref<8x1xf32, #tpu.memory_space<vmem>>, vector<8x1xf32>
    %6 = vector.broadcast %5 : vector<8x1xf32> to vector<8x256xf32>
    %7 = arith.addf %4, %6 : vector<8x256xf32>
    %8 = arith.negf %7 : vector<8x256xf32>
    %9 = math.exp %8 : vector<8x256xf32>
    %cst_6 = arith.constant 1.000000e+00 : f32
    %10 = vector.broadcast %cst_6 : f32 to vector<8x256xf32>
    %11 = arith.addf %10, %9 : vector<8x256xf32>
    %12 = arith.divf %10, %11 : vector<8x256xf32>
    %13 = arith.mulf %7, %12 : vector<8x256xf32>
    %14 = vector.shape_cast %13 : vector<8x256xf32> to vector<8x16x16xf32>
    %c0_7 = arith.constant 0 : index
    %c0_8 = arith.constant 0 : index
    %15 = vector.load %arg6[%c0_7, %c0_8] : memref<16x32xf32, #tpu.memory_space<vmem>>, vector<16x32xf32>
    %cst_9 = arith.constant dense<0.000000e+00> : vector<8x16x32xf32>
    %16 = tpu.matmul %14, %15, %cst_9 {dimension_numbers = #tpu.dot_dimension_numbers<[2], [0], [0, 1], [1], [0, 0, 0, 1, 1, 1], [], []>} : vector<8x16x16xf32>, vector<16x32xf32>, vector<8x16x32xf32> -> vector<8x16x32xf32>
    %c0_10 = arith.constant 0 : index
    %c0_11 = arith.constant 0 : index
    %17 = vector.load %arg5[%c0_10, %c0_11] : memref<32x16xf32, #tpu.memory_space<vmem>>, vector<32x16xf32>
    %18 = vector.shape_cast %17 : vector<32x16xf32> to vector<1x32x16xf32>
    %19 = vector.shape_cast %18 : vector<1x32x16xf32> to vector<1x32x16xf32>
    %20 = vector.broadcast %19 : vector<1x32x16xf32> to vector<8x32x16xf32>
    %cst_12 = arith.constant dense<0.000000e+00> : vector<8x32x32xf32>
    %21 = tpu.matmul %20, %16, %cst_12 {dimension_numbers = #tpu.dot_dimension_numbers<[2], [1], [1], [2], [0, 0, 0, 1, 1, 2], [0], [0]>} : vector<8x32x16xf32>, vector<8x16x32xf32>, vector<8x32x32xf32> -> vector<8x32x32xf32>
    %c0_13 = arith.constant 0 : index
    %c0_14 = arith.constant 0 : index
    %c0_15 = arith.constant 0 : index
    %c0_16 = arith.constant 0 : index
    %22 = vector.load %arg7[%c0_13, %c0_14, %c0_15, %c0_16] : memref<1x8x32x32xf32, #tpu.memory_space<vmem>>, vector<1x8x32x32xf32>
    %23 = vector.shape_cast %22 : vector<1x8x32x32xf32> to vector<8x32x32xf32>
    %24 = vector.shape_cast %21 : vector<8x32x32xf32> to vector<1x8x32x32xf32>
    tpu.vector_store %arg7[%c0_13, %c0_14, %c0_15, %c0_16], %24 {strides = array<i32>} : memref<1x8x32x32xf32, #tpu.memory_space<vmem>>, vector<1x8x32x32xf32>,
    return
  }
  func.func @transform_0(%arg0: i32, %arg1: i32) -> (i32, i32, i32) {
    %c0_i32 = arith.constant 0 : i32
    %c0_i32_0 = arith.constant 0 : i32
    %c0_i32_1 = arith.constant 0 : i32
    return %arg0, %c0_i32, %c0_i32_0 : i32, i32, i32
  }
  func.func @transform_1(%arg0: i32, %arg1: i32) -> (i32, i32) {
    %c0_i32 = arith.constant 0 : i32
    %c0_i32_0 = arith.constant 0 : i32
    return %arg1, %c0_i32 : i32, i32
  }
  func.func @transform_2(%arg0: i32, %arg1: i32) -> (i32, i32) {
    %c0_i32 = arith.constant 0 : i32
    %c0_i32_0 = arith.constant 0 : i32
    return %arg1, %c0_i32 : i32, i32
  }
  func.func @transform_3(%arg0: i32, %arg1: i32) -> (i32, i32) {
    %c0_i32 = arith.constant 0 : i32
    %c0_i32_0 = arith.constant 0 : i32
    %c0_i32_1 = arith.constant 0 : i32
    return %c0_i32, %c0_i32_0 : i32, i32
  }
  func.func @transform_4(%arg0: i32, %arg1: i32) -> (i32, i32) {
    %c0_i32 = arith.constant 0 : i32
    %c0_i32_0 = arith.constant 0 : i32
    %c0_i32_1 = arith.constant 0 : i32
    return %c0_i32, %c0_i32_0 : i32, i32
  }
  func.func @transform_5(%arg0: i32, %arg1: i32) -> (i32, i32, i32, i32) {
    %c0_i32 = arith.constant 0 : i32
    %c0_i32_0 = arith.constant 0 : i32
    %c0_i32_1 = arith.constant 0 : i32
    return %arg0, %arg1, %c0_i32, %c0_i32_0 : i32, i32, i32, i32
  }
}

</mosaic_0001>

<llo_original>
// kernel: tpu_custom_call.1
$region0: #{tpu_custom_call.1}
  #allocation0 [shape = 'u32[]', space=smem, size = 0x4, offset = 0x4, fixed_abs, tag = 'smem constant byte address 0x4 - core index']
  #allocation1 [shape = 'u32[144,128]{1,0:T(1,128)}', space=vmem, size = 0x12000, scoped, tag = 'internal scratch']
  %s0 = inlined_call_operand.vmem [shape: bf16[2,4,256], index: 0, kind: input, shape index: {}]
  %s1 = inlined_call_operand.vmem [shape: f32[16,4], index: 1, kind: input, shape index: {}]
  %s2 = inlined_call_operand.vmem [shape: f32[16,1], index: 2, kind: input, shape index: {}]
  %s3 = inlined_call_operand.vmem [shape: f32[32,16], index: 3, kind: input, shape index: {}]
  %s4 = inlined_call_operand.vmem [shape: f32[16,32], index: 4, kind: input, shape index: {}]
  %s5 = inlined_call_operand.hbm [shape: f32[2,16,32,32], index: 5, kind: output, shape index: {}]
  %s6 = sld [smem:[#allocation0]]
  $region53: #{tpu_custom_call.1} parent=0
    _
  %s8 = ssub.s32 1, %s6
  %s9 = scalar_select 0, %s8, %s6
  $region1: #{tpu_custom_call.1} parent=0
    #allocation2 [shape = 'u8[262144]{0}', space=vmem, size = 0x40000, scoped, tag = 'output window, operand 0']
    #allocation3 [shape = 's32[2]{0}', space=sflag, size = 0x8, scoped, tag = 'scoped memory for tpu_custom_call.1']
    %10 = vsyncpa [#allocation3], 0
    %s11 = scalar_lea.sflag [#allocation3], 1
    %12 = vsyncpa %s11, 0
    loop: start=0, step=1, limit=6
    $region2: #{tpu_custom_call.1} parent=1 // loop_pre_header
      _
    $region3: #{tpu_custom_call.1} parent=1 // loop_header
      %s14 = sphi 0, %s18
      %p15 = scmp.ge.s32.totalorder %s14, 6
      %s21 = sphi 0, %s33
      %s22 = sphi 0, %s29
      %s23 = sphi 0, %s21
      %s24 = sphi 0, %s22
      %s25 = sphi 0, %s23
      %s26 = sphi 0, %s24
      %s36 = sphi 0, %s38
      %s39 = sphi 0, %s36
      %s40 = sphi 0, %s39
      %s56 = sphi 0, %s40
      %s62 = sphi 0, %s64
      %s65 = sphi 0, %s62
      %s66 = sphi 0, %s65
      %s82 = sphi 0, %s66
      %s88 = sphi 0, %s90
      %s91 = sphi 0, %s88
      %s92 = sphi 0, %s91
      %s108 = sphi 0, %s92
      %s112 = sphi 0, %s112
      %s114 = sphi 0, %s112
      %s115 = sphi 0, %s114
      %s129 = sphi 0, %s115
      %s133 = sphi 0, %s133
      %s135 = sphi 0, %s133
      %s136 = sphi 0, %s135
      %s150 = sphi 0, %s136
      %s158 = sphi 0, %s160
      %s161 = sphi 0, %s158
      %s162 = sphi 0, %s161
      %s178 = sphi 0, %s162
    $region4: #{tpu_custom_call.1} parent=1 // loop_header_branch
      %17 = sbr.rel (%p15) target = $region8
    $region5: #{tpu_custom_call.1} parent=1 // loop_body
      %s19 = ssub.s32 %s14, 1
      %s20 = ssub.s32 %s14, 2
      %s27 = sadd.s32 1, %s22
      %p28 = scmp.ge.s32.totalorder %s27, 2
      %s29 = scalar_select %p28, 0, %s27
      %s30 = sadd.s32 1, %s21
      %s31 = scalar_select %p28, %s30, %s21
      %p32 = scmp.ge.s32.totalorder %s31, 2
      %s33 = scalar_select %p32, 0, %s31
      %s34 = ssub.s32 %s21, %s33
      %p35 = scmp.eq.s32.totalorder %s34, 0
      %s37 = sadd.s32 %s36, 1
      %s38 = scalar_select %p35, %s36, %s37
      %p41 = pneg %p35
      %p42 = scmp.eq.s32.totalorder %s14, 3
      %p43 = por %p41, %p42
      %p44 = scmp.ne.s32.totalorder %s36, %s39
      %p45 = scmp.eq.s32.totalorder %s14, 0
      %p46 = por %p44, %p45
      %p47 = scmp.ne.s32.totalorder %s36, %s39
      %p48 = scmp.eq.s32.totalorder %s19, 3
      %p49 = por %p47, %p48
      %p50 = scmp.ne.s32.totalorder %s39, %s40
      %p51 = scmp.eq.s32.totalorder %s19, 0
      %p52 = por %p50, %p51
      %p53 = scmp.ne.s32.totalorder %s39, %s40
      %p54 = scmp.eq.s32.totalorder %s20, 3
      %p55 = por %p53, %p54
      %p57 = scmp.ne.s32.totalorder %s40, %s56
      %p58 = scmp.eq.s32.totalorder %s20, 0
      %p59 = por %p57, %p58
      %s60 = ssub.s32 %s22, %s29
      %p61 = scmp.eq.s32.totalorder %s60, 0
      %s63 = sadd.s32 %s62, 1
      %s64 = scalar_select %p61, %s62, %s63
      %p67 = pneg %p61
      %p68 = scmp.eq.s32.totalorder %s14, 3
      %p69 = por %p67, %p68
      %p70 = scmp.ne.s32.totalorder %s62, %s65
      %p71 = scmp.eq.s32.totalorder %s14, 0
      %p72 = por %p70, %p71
      %p73 = scmp.ne.s32.totalorder %s62, %s65
      %p74 = scmp.eq.s32.totalorder %s19, 3
      %p75 = por %p73, %p74
      %p76 = scmp.ne.s32.totalorder %s65, %s66
      %p77 = scmp.eq.s32.totalorder %s19, 0
      %p78 = por %p76, %p77
      %p79 = scmp.ne.s32.totalorder %s65, %s66
      %p80 = scmp.eq.s32.totalorder %s20, 3
      %p81 = por %p79, %p80
      %p83 = scmp.ne.s32.totalorder %s66, %s82
      %p84 = scmp.eq.s32.totalorder %s20, 0
      %p85 = por %p83, %p84
      %s86 = ssub.s32 %s22, %s29
      %p87 = scmp.eq.s32.totalorder %s86, 0
      %s89 = sadd.s32 %s88, 1
      %s90 = scalar_select %p87, %s88, %s89
      %p93 = pneg %p87
      %p94 = scmp.eq.s32.totalorder %s14, 3
      %p95 = por %p93, %p94
      %p96 = scmp.ne.s32.totalorder %s88, %s91
      %p97 = scmp.eq.s32.totalorder %s14, 0
      %p98 = por %p96, %p97
      %p99 = scmp.ne.s32.totalorder %s88, %s91
      %p100 = scmp.eq.s32.totalorder %s19, 3
      %p101 = por %p99, %p100
      %p102 = scmp.ne.s32.totalorder %s91, %s92
      %p103 = scmp.eq.s32.totalorder %s19, 0
      %p104 = por %p102, %p103
      %p105 = scmp.ne.s32.totalorder %s91, %s92
      %p106 = scmp.eq.s32.totalorder %s20, 3
      %p107 = por %p105, %p106
      %p109 = scmp.ne.s32.totalorder %s92, %s108
      %p110 = scmp.eq.s32.totalorder %s20, 0
      %p111 = por %p109, %p110
      %s113 = sadd.s32 %s112, 1
      %p116 = scmp.eq.s32.totalorder %s14, 3
      %p117 = scmp.ne.s32.totalorder %s112, %s114
      %p118 = scmp.eq.s32.totalorder %s14, 0
      %p119 = por %p117, %p118
      %p120 = scmp.ne.s32.totalorder %s112, %s114
      %p121 = scmp.eq.s32.totalorder %s19, 3
      %p122 = por %p120, %p121
      %p123 = scmp.ne.s32.totalorder %s114, %s115
      %p124 = scmp.eq.s32.totalorder %s19, 0
      %p125 = por %p123, %p124
      %p126 = scmp.ne.s32.totalorder %s114, %s115
      %p127 = scmp.eq.s32.totalorder %s20, 3
      %p128 = por %p126, %p127
      %p130 = scmp.ne.s32.totalorder %s115, %s129
      %p131 = scmp.eq.s32.totalorder %s20, 0
      %p132 = por %p130, %p131
      %s134 = sadd.s32 %s133, 1
      %p137 = scmp.eq.s32.totalorder %s14, 3
      %p138 = scmp.ne.s32.totalorder %s133, %s135
      %p139 = scmp.eq.s32.totalorder %s14, 0
      %p140 = por %p138, %p139
      %p141 = scmp.ne.s32.totalorder %s133, %s135
      %p142 = scmp.eq.s32.totalorder %s19, 3
      %p143 = por %p141, %p142
      %p144 = scmp.ne.s32.totalorder %s135, %s136
      %p145 = scmp.eq.s32.totalorder %s19, 0
      %p146 = por %p144, %p145
      %p147 = scmp.ne.s32.totalorder %s135, %s136
      %p148 = scmp.eq.s32.totalorder %s20, 3
      %p149 = por %p147, %p148
      %p151 = scmp.ne.s32.totalorder %s136, %s150
      %p152 = scmp.eq.s32.totalorder %s20, 0
      %p153 = por %p151, %p152
      %s154 = ssub.s32 %s21, %s33
      %s155 = ssub.s32 %s22, %s29
      %s156 = sor.u32 %s154, %s155
      %p157 = scmp.eq.s32.totalorder %s156, 0
      %s159 = sadd.s32 %s158, 1
      %s160 = scalar_select %p157, %s158, %s159
      %p163 = pneg %p157
      %p164 = scmp.eq.s32.totalorder %s14, 3
      %p165 = por %p163, %p164
      %p166 = scmp.ne.s32.totalorder %s158, %s161
      %p167 = scmp.eq.s32.totalorder %s14, 0
      %p168 = por %p166, %p167
      %p169 = scmp.ne.s32.totalorder %s158, %s161
      %p170 = scmp.eq.s32.totalorder %s19, 3
      %p171 = por %p169, %p170
      %p172 = scmp.ne.s32.totalorder %s161, %s162
      %p173 = scmp.eq.s32.totalorder %s19, 0
      %p174 = por %p172, %p173
      %p175 = scmp.ne.s32.totalorder %s161, %s162
      %p176 = scmp.eq.s32.totalorder %s20, 3
      %p177 = por %p175, %p176
      %p179 = scmp.ne.s32.totalorder %s162, %s178
      %p180 = scmp.eq.s32.totalorder %s20, 0
      %p181 = por %p179, %p180
      %p182 = scmp.le.s32.totalorder 1, %s14
      %p183 = scmp.lt.s32.totalorder %s14, 5
      %p184 = pnand %p182, %p183
      %p185 = pneg %p184
      // Predicated region
      $region9: #{tpu_custom_call.1} parent=5 // pred_check
        _
      $region10: #{tpu_custom_call.1} parent=5 // pred_check_branch
        %187 = sbr.rel (%p184) target = $region12
      $region11: #{tpu_custom_call.1} parent=5 // pred_region
        %s188 = ssub.s32 %s14, 1
        // Predicated region
        $region13: #{tpu_custom_call.1} parent=11 // pred_check
          %p189 = pneg %p125
        $region14: #{tpu_custom_call.1} parent=11 // pred_check_branch
          %191 = sbr.rel (%p189) target = $region16
        $region15: #{tpu_custom_call.1} parent=11 // pred_region
          _
        $region16: #{tpu_custom_call.1} parent=11 // pred_fallthru
          _
        // Predicated region
        $region17: #{tpu_custom_call.1} parent=11 // pred_check
          %p192 = pneg %p146
        $region18: #{tpu_custom_call.1} parent=11 // pred_check_branch
          %194 = sbr.rel (%p192) target = $region20
        $region19: #{tpu_custom_call.1} parent=11 // pred_region
          _
        $region20: #{tpu_custom_call.1} parent=11 // pred_fallthru
          _
      $region12: #{tpu_custom_call.1} parent=5 // pred_fallthru
        _
      %p195 = scmp.lt.s32.totalorder %s14, 4
      // Predicated region
      $region21: #{tpu_custom_call.1} parent=5 // pred_check
        %p196 = pneg %p195
      $region22: #{tpu_custom_call.1} parent=5 // pred_check_branch
        %198 = sbr.rel (%p196) target = $region24
      $region23: #{tpu_custom_call.1} parent=5 // pred_region
        // Predicated region
        $region25: #{tpu_custom_call.1} parent=23 // pred_check
          %p199 = pneg %p46
        $region26: #{tpu_custom_call.1} parent=23 // pred_check_branch
          %201 = sbr.rel (%p199) target = $region28
        $region27: #{tpu_custom_call.1} parent=23 // pred_region
          %p202 = scmp.lt.s32.totalorder %s21, 1
          %s203 = scalar_select %p202, %s21, 1
          %s204 = smul.addr %s203, 2
          %s205 = smul.addr %s204, 2
          %s206 = scalar_lea.vmem %s0, %s205
        $region28: #{tpu_custom_call.1} parent=23 // pred_fallthru
          _
        // Predicated region
        $region29: #{tpu_custom_call.1} parent=23 // pred_check
          %p207 = pneg %p72
        $region30: #{tpu_custom_call.1} parent=23 // pred_check_branch
          %209 = sbr.rel (%p207) target = $region32
        $region31: #{tpu_custom_call.1} parent=23 // pred_region
          %p210 = scmp.lt.s32.totalorder %s22, 1
          %s211 = scalar_select %p210, %s22, 1
          %s212 = smul.addr %s211, 8
          %s213 = scalar_lea.vmem %s1, %s212
        $region32: #{tpu_custom_call.1} parent=23 // pred_fallthru
          _
        // Predicated region
        $region33: #{tpu_custom_call.1} parent=23 // pred_check
          %p214 = pneg %p98
        $region34: #{tpu_custom_call.1} parent=23 // pred_check_branch
          %216 = sbr.rel (%p214) target = $region36
        $region35: #{tpu_custom_call.1} parent=23 // pred_region
          %p217 = scmp.lt.s32.totalorder %s22, 1
          %s218 = scalar_select %p217, %s22, 1
          %s219 = smul.addr %s218, 8
          %s220 = scalar_lea.vmem %s2, %s219
        $region36: #{tpu_custom_call.1} parent=23 // pred_fallthru
          _
      $region24: #{tpu_custom_call.1} parent=5 // pred_fallthru
        _
      %p221 = scmp.le.s32.totalorder 1, %s14
      %p222 = scmp.lt.s32.totalorder %s14, 5
      %p223 = pnand %p221, %p222
      %p224 = pneg %p223
      // Predicated region
      $region37: #{tpu_custom_call.1} parent=5 // pred_check
        _
      $region38: #{tpu_custom_call.1} parent=5 // pred_check_branch
        %226 = sbr.rel (%p223) target = $region40
      $region39: #{tpu_custom_call.1} parent=5 // pred_region
        %s227 = ssub.s32 %s14, 1
        %p228 = scmp.lt.s32.totalorder %s23, 1
        %s229 = scalar_select %p228, %s23, 1
        %s230 = smul.addr %s229, 2
        %s231 = smul.addr %s230, 2
        %s232 = scalar_lea.vmem %s0, %s231
        %p233 = pneg %p52
        %p234 = pneg %p49
        %p235 = scmp.lt.s32.totalorder %s24, 1
        %s236 = scalar_select %p235, %s24, 1
        %s237 = smul.addr %s236, 8
        %s238 = scalar_lea.vmem %s1, %s237
        %p239 = pneg %p78
        %p240 = pneg %p75
        %p241 = scmp.lt.s32.totalorder %s24, 1
        %s242 = scalar_select %p241, %s24, 1
        %s243 = smul.addr %s242, 8
        %s244 = scalar_lea.vmem %s2, %s243
        %p245 = pneg %p104
        %p246 = pneg %p101
        %p247 = pneg %p125
        %p248 = pneg %p122
        %p249 = pneg %p146
        %p250 = pneg %p143
        %p251 = pneg %p174
        %p252 = pneg %p171
        %s253 = sand.u32 %s161, 1
        %s254 = scalar_lea.sflag [#allocation3], %s253
        %s255 = sand.u32 %s161, 1
        %s256 = smul.addr %s255, 256
        %s257 = scalar_lea.vmem [#allocation2], %s256
        %p258 = scmp.lt.s32.totalorder %s23, 1
        %s259 = scalar_select %p258, %s23, 1
        %s260 = smul.addr %s259, 2
        %s261 = smul.addr %s260, 2
        %s262 = scalar_lea.vmem %s0, %s261
        %p263 = scmp.lt.s32.totalorder %s24, 1
        %s264 = scalar_select %p263, %s24, 1
        %s265 = smul.addr %s264, 8
        %s266 = scalar_lea.vmem %s1, %s265
        %p267 = scmp.lt.s32.totalorder %s24, 1
        %s268 = scalar_select %p267, %s24, 1
        %s269 = smul.addr %s268, 8
        %s270 = scalar_lea.vmem %s2, %s269
        %s271 = smul.u32 8, %s24
        %v273 = vld [vmem:[%s262] sm:$0xf]
        %v274 = vld [vmem:[%s266] sm:$0xff]
        %v275 = vpack.c.bf16 %v274, %v274
        %v276 = vld [vmem:[%s270] sm:$0xff]
        %278 = vset.pattern.permute.xlu0 0
        %279 = vperm.xlu0 %278, %v276
        %v280 = vpop.permute.xlu0 %279
        %v284 = vunpack.c.l.s4 1983009808
        %v285 = vunpack.c.0.s8 %v284
        %v286 = vlaneseq
        %v287 = vshrl.u32 %v286, 7
        %v288 = vsub.s32 %v285, %v287
        %v289 = vrot.slane %v273, %v288
        %v290 = vcombine.high %v289, %v289
        %vm291 = vcmask 31744
        %v293 = vsel %vm291, %v275, 0
        %vm295 = vcmask 1041408
        %v297 = vsel %vm295, %v289, 0
        %v300 = vsel %vm295, %v290, 0
        %302 = vmatprep.subr.bf16.mxu0 0
        %303 = vmatpush1.bf16.msra.mxu0 0
        %304 = vmatprep.subr.bf16.mxu0 0
        %305 = vmatpush1.bf16.msra.mxu0 0
        %306 = vmatprep.subr.bf16.mxu0 0
        %307 = vmatpush1.bf16.msra.mxu0 0
        %308 = vmatprep.subr.bf16.mxu0 0
        %309 = vmatpush1.bf16.msra.mxu0 0
        %310 = vmatprep.subr.bf16.mxu0 0
        %311 = vmatpush1.bf16.msra.mxu0 0
        %312 = vmatprep.subr.bf16.mxu0 0
        %313 = vmatpush1.bf16.msra.mxu0 0
        %314 = vmatprep.subr.bf16.mxu0 0
        %315 = vmatpush1.bf16.msra.mxu0 0
        %316 = vmatprep.subr.bf16.mxu0 %v300
        %317 = vmatpush1.bf16.msra.mxu0 %v297
        %318 = vmatprep.subr.bf16.mxu0 0
        %319 = vmatpush2.bf16.msra.mxu0 0
        %320 = vmatprep.subr.bf16.mxu0 0
        %321 = vmatpush2.bf16.msra.mxu0 0
        %322 = vmatprep.subr.bf16.mxu0 0
        %323 = vmatpush2.bf16.msra.mxu0 0
        %324 = vmatprep.subr.bf16.mxu0 0
        %325 = vmatpush2.bf16.msra.mxu0 0
        %326 = vmatprep.subr.bf16.mxu0 0
        %327 = vmatpush2.bf16.msra.mxu0 0
        %328 = vmatprep.subr.bf16.mxu0 0
        %329 = vmatpush2.bf16.msra.mxu0 0
        %330 = vmatprep.subr.bf16.mxu0 0
        %331 = vmatpush2.bf16.msra.mxu0 0
        %332 = vmatprep.subr.bf16.mxu0 0
        %333 = vmatpush2.bf16.msra.mxu0 0
        %334 = vmatprep.mubr.bf16.mxu0 0
        %335 = vmatmul.mubr.bf16.gmra.mxu0 %v293
        %v336 = vpop.f32.mrf.mxu0
        %v337 = vadd.f32 %v280, %v336
        %v338 = vpop.f32.mrf.mxu0
        %v339 = vadd.f32 %v280, %v338
        %v340 = vpop.f32.mrf.mxu0
        %v341 = vpop.f32.mrf.mxu0
        %342 = vdwg.mxu0
        %v343 = vxor.u32 %v337, 2147483648
        %v344 = vxor.u32 %v339, 2147483648
        %v345 = vmul.f32 %v343, 1.442695
        %v346 = vpow.pop %v345
        %v347 = vmul.f32 %v344, 1.442695
        %v348 = vpow.pop %v347
        %v349 = vadd.f32 %v346, 1.0
        %v350 = vadd.f32 %v348, 1.0
        %v351 = vrcp.pop %v349
        %v352 = vmul.f32 1.0, %v351
        %v353 = vrcp.pop %v350
        %v354 = vmul.f32 1.0, %v353
        %v355 = vmul.f32 %v337, %v352
        %v356 = vmul.f32 %v339, %v354
        %358 = vrot.lane.b32.xlu0 %v355, 112
        %v359 = vpop.permute.xlu0 %358
        %361 = vrot.lane.b32.xlu0 %v355, 96
        %v362 = vpop.permute.xlu0 %361
        %364 = vrot.lane.b32.xlu0 %v355, 80
        %v365 = vpop.permute.xlu0 %364
        %367 = vrot.lane.b32.xlu0 %v355, 64
        %v368 = vpop.permute.xlu0 %367
        %370 = vrot.lane.b32.xlu0 %v355, 48
        %v371 = vpop.permute.xlu0 %370
        %373 = vrot.lane.b32.xlu0 %v355, 32
        %v374 = vpop.permute.xlu0 %373
        %376 = vrot.lane.b32.xlu0 %v355, 16
        %v377 = vpop.permute.xlu0 %376
        %380 = vrot.lane.b32.xlu0 %v356, 112
        %v381 = vpop.permute.xlu0 %380
        %383 = vrot.lane.b32.xlu0 %v356, 96
        %v384 = vpop.permute.xlu0 %383
        %386 = vrot.lane.b32.xlu0 %v356, 80
        %v387 = vpop.permute.xlu0 %386
        %389 = vrot.lane.b32.xlu0 %v356, 64
        %v390 = vpop.permute.xlu0 %389
        %392 = vrot.lane.b32.xlu0 %v356, 48
        %v393 = vpop.permute.xlu0 %392
        %395 = vrot.lane.b32.xlu0 %v356, 32
        %v396 = vpop.permute.xlu0 %395
        %398 = vrot.lane.b32.xlu0 %v356, 16
        %v399 = vpop.permute.xlu0 %398
        %v401 = vcombine.low %v355, %v362
        %v402 = vcombine.high %v355, %v362
        %v404 = vunpack.c.l.s4 1983009808
        %v405 = vunpack.c.0.s8 %v404
        %v406 = vlaneseq
        %v407 = vshrl.u32 %v406, 7
        %v408 = vsub.s32 %v405, %v407
        %v409 = vrot.slane %v401, %v408
        %v411 = vunpack.c.l.s4 1983009808
        %v412 = vunpack.c.0.s8 %v411
        %v413 = vlaneseq
        %v414 = vshrl.u32 %v413, 7
        %v415 = vsub.s32 %v412, %v414
        %v416 = vrot.slane %v402, %v415
        %v417 = vcombine.low %v359, %v365
        %v418 = vcombine.high %v359, %v365
        %v420 = vunpack.c.l.s4 1983009808
        %v421 = vunpack.c.0.s8 %v420
        %v422 = vlaneseq
        %v423 = vshrl.u32 %v422, 7
        %v424 = vsub.s32 %v421, %v423
        %v425 = vrot.slane %v417, %v424
        %v427 = vunpack.c.l.s4 1983009808
        %v428 = vunpack.c.0.s8 %v427
        %v429 = vlaneseq
        %v430 = vshrl.u32 %v429, 7
        %v431 = vsub.s32 %v428, %v430
        %v432 = vrot.slane %v418, %v431
        %v433 = vcombine.low %v368, %v374
        %v434 = vcombine.high %v368, %v374
        %v436 = vunpack.c.l.s4 1983009808
        %v437 = vunpack.c.0.s8 %v436
        %v438 = vlaneseq
        %v439 = vshrl.u32 %v438, 7
        %v440 = vsub.s32 %v437, %v439
        %v441 = vrot.slane %v433, %v440
        %v443 = vunpack.c.l.s4 1983009808
        %v444 = vunpack.c.0.s8 %v443
        %v445 = vlaneseq
        %v446 = vshrl.u32 %v445, 7
        %v447 = vsub.s32 %v444, %v446
        %v448 = vrot.slane %v434, %v447
        %v449 = vcombine.low %v371, %v377
        %v450 = vcombine.high %v371, %v377
        %v452 = vunpack.c.l.s4 1983009808
        %v453 = vunpack.c.0.s8 %v452
        %v454 = vlaneseq
        %v455 = vshrl.u32 %v454, 7
        %v456 = vsub.s32 %v453, %v455
        %v457 = vrot.slane %v449, %v456
        %v459 = vunpack.c.l.s4 1983009808
        %v460 = vunpack.c.0.s8 %v459
        %v461 = vlaneseq
        %v462 = vshrl.u32 %v461, 7
        %v463 = vsub.s32 %v460, %v462
        %v464 = vrot.slane %v450, %v463
        %v465 = vcombine.low %v409, %v425
        %v466 = vcombine.high %v409, %v425
        %v468 = vunpack.c.l.s4 1934713408
        %v469 = vunpack.c.0.s8 %v468
        %v470 = vlaneseq
        %v471 = vshrl.u32 %v470, 7
        %v472 = vsub.s32 %v469, %v471
        %v473 = vrot.slane %v465, %v472
        %v475 = vunpack.c.l.s4 1934713408
        %v476 = vunpack.c.0.s8 %v475
        %v477 = vlaneseq
        %v478 = vshrl.u32 %v477, 7
        %v479 = vsub.s32 %v476, %v478
        %v480 = vrot.slane %v466, %v479
        %v481 = vcombine.low %v416, %v432
        %v482 = vcombine.high %v416, %v432
        %v484 = vunpack.c.l.s4 1934713408
        %v485 = vunpack.c.0.s8 %v484
        %v486 = vlaneseq
        %v487 = vshrl.u32 %v486, 7
        %v488 = vsub.s32 %v485, %v487
        %v489 = vrot.slane %v481, %v488
        %v491 = vunpack.c.l.s4 1934713408
        %v492 = vunpack.c.0.s8 %v491
        %v493 = vlaneseq
        %v494 = vshrl.u32 %v493, 7
        %v495 = vsub.s32 %v492, %v494
        %v496 = vrot.slane %v482, %v495
        %v497 = vcombine.low %v441, %v457
        %v498 = vcombine.high %v441, %v457
        %v500 = vunpack.c.l.s4 1934713408
        %v501 = vunpack.c.0.s8 %v500
        %v502 = vlaneseq
        %v503 = vshrl.u32 %v502, 7
        %v504 = vsub.s32 %v501, %v503
        %v505 = vrot.slane %v497, %v504
        %v507 = vunpack.c.l.s4 1934713408
        %v508 = vunpack.c.0.s8 %v507
        %v509 = vlaneseq
        %v510 = vshrl.u32 %v509, 7
        %v511 = vsub.s32 %v508, %v510
        %v512 = vrot.slane %v498, %v511
        %v513 = vcombine.low %v448, %v464
        %v514 = vcombine.high %v448, %v464
        %v516 = vunpack.c.l.s4 1934713408
        %v517 = vunpack.c.0.s8 %v516
        %v518 = vlaneseq
        %v519 = vshrl.u32 %v518, 7
        %v520 = vsub.s32 %v517, %v519
        %v521 = vrot.slane %v513, %v520
        %v523 = vunpack.c.l.s4 1934713408
        %v524 = vunpack.c.0.s8 %v523
        %v525 = vlaneseq
        %v526 = vshrl.u32 %v525, 7
        %v527 = vsub.s32 %v524, %v526
        %v528 = vrot.slane %v514, %v527
        %v529 = vcombine.low %v473, %v505
        %v530 = vcombine.high %v473, %v505
        %v531 = vcombine.low %v480, %v512
        %v532 = vcombine.high %v480, %v512
        %v533 = vcombine.low %v489, %v521
        %v534 = vcombine.high %v489, %v521
        %v535 = vcombine.low %v496, %v528
        %v536 = vcombine.high %v496, %v528
        %v537 = vcombine.low %v356, %v384
        %v538 = vcombine.high %v356, %v384
        %v540 = vunpack.c.l.s4 1983009808
        %v541 = vunpack.c.0.s8 %v540
        %v542 = vlaneseq
        %v543 = vshrl.u32 %v542, 7
        %v544 = vsub.s32 %v541, %v543
        %v545 = vrot.slane %v537, %v544
        %v547 = vunpack.c.l.s4 1983009808
        %v548 = vunpack.c.0.s8 %v547
        %v549 = vlaneseq
        %v550 = vshrl.u32 %v549, 7
        %v551 = vsub.s32 %v548, %v550
        %v552 = vrot.slane %v538, %v551
        %v553 = vcombine.low %v381, %v387
        %v554 = vcombine.high %v381, %v387
        %v556 = vunpack.c.l.s4 1983009808
        %v557 = vunpack.c.0.s8 %v556
        %v558 = vlaneseq
        %v559 = vshrl.u32 %v558, 7
        %v560 = vsub.s32 %v557, %v559
        %v561 = vrot.slane %v553, %v560
        %v563 = vunpack.c.l.s4 1983009808
        %v564 = vunpack.c.0.s8 %v563
        %v565 = vlaneseq
        %v566 = vshrl.u32 %v565, 7
        %v567 = vsub.s32 %v564, %v566
        %v568 = vrot.slane %v554, %v567
        %v569 = vcombine.low %v390, %v396
        %v570 = vcombine.high %v390, %v396
        %v572 = vunpack.c.l.s4 1983009808
        %v573 = vunpack.c.0.s8 %v572
        %v574 = vlaneseq
        %v575 = vshrl.u32 %v574, 7
        %v576 = vsub.s32 %v573, %v575
        %v577 = vrot.slane %v569, %v576
        %v579 = vunpack.c.l.s4 1983009808
        %v580 = vunpack.c.0.s8 %v579
        %v581 = vlaneseq
        %v582 = vshrl.u32 %v581, 7
        %v583 = vsub.s32 %v580, %v582
        %v584 = vrot.slane %v570, %v583
        %v585 = vcombine.low %v393, %v399
        %v586 = vcombine.high %v393, %v399
        %v588 = vunpack.c.l.s4 1983009808
        %v589 = vunpack.c.0.s8 %v588
        %v590 = vlaneseq
        %v591 = vshrl.u32 %v590, 7
        %v592 = vsub.s32 %v589, %v591
        %v593 = vrot.slane %v585, %v592
        %v595 = vunpack.c.l.s4 1983009808
        %v596 = vunpack.c.0.s8 %v595
        %v597 = vlaneseq
        %v598 = vshrl.u32 %v597, 7
        %v599 = vsub.s32 %v596, %v598
        %v600 = vrot.slane %v586, %v599
        %v601 = vcombine.low %v545, %v561
        %v602 = vcombine.high %v545, %v561
        %v604 = vunpack.c.l.s4 1934713408
        %v605 = vunpack.c.0.s8 %v604
        %v606 = vlaneseq
        %v607 = vshrl.u32 %v606, 7
        %v608 = vsub.s32 %v605, %v607
        %v609 = vrot.slane %v601, %v608
        %v611 = vunpack.c.l.s4 1934713408
        %v612 = vunpack.c.0.s8 %v611
        %v613 = vlaneseq
        %v614 = vshrl.u32 %v613, 7
        %v615 = vsub.s32 %v612, %v614
        %v616 = vrot.slane %v602, %v615
        %v617 = vcombine.low %v552, %v568
        %v618 = vcombine.high %v552, %v568
        %v620 = vunpack.c.l.s4 1934713408
        %v621 = vunpack.c.0.s8 %v620
        %v622 = vlaneseq
        %v623 = vshrl.u32 %v622, 7
        %v624 = vsub.s32 %v621, %v623
        %v625 = vrot.slane %v617, %v624
        %v627 = vunpack.c.l.s4 1934713408
        %v628 = vunpack.c.0.s8 %v627
        %v629 = vlaneseq
        %v630 = vshrl.u32 %v629, 7
        %v631 = vsub.s32 %v628, %v630
        %v632 = vrot.slane %v618, %v631
        %v633 = vcombine.low %v577, %v593
        %v634 = vcombine.high %v577, %v593
        %v636 = vunpack.c.l.s4 1934713408
        %v637 = vunpack.c.0.s8 %v636
        %v638 = vlaneseq
        %v639 = vshrl.u32 %v638, 7
        %v640 = vsub.s32 %v637, %v639
        %v641 = vrot.slane %v633, %v640
        %v643 = vunpack.c.l.s4 1934713408
        %v644 = vunpack.c.0.s8 %v643
        %v645 = vlaneseq
        %v646 = vshrl.u32 %v645, 7
        %v647 = vsub.s32 %v644, %v646
        %v648 = vrot.slane %v634, %v647
        %v649 = vcombine.low %v584, %v600
        %v650 = vcombine.high %v584, %v600
        %v652 = vunpack.c.l.s4 1934713408
        %v653 = vunpack.c.0.s8 %v652
        %v654 = vlaneseq
        %v655 = vshrl.u32 %v654, 7
        %v656 = vsub.s32 %v653, %v655
        %v657 = vrot.slane %v649, %v656
        %v659 = vunpack.c.l.s4 1934713408
        %v660 = vunpack.c.0.s8 %v659
        %v661 = vlaneseq
        %v662 = vshrl.u32 %v661, 7
        %v663 = vsub.s32 %v660, %v662
        %v664 = vrot.slane %v650, %v663
        %v665 = vcombine.low %v609, %v641
        %v666 = vcombine.high %v609, %v641
        %v667 = vcombine.low %v616, %v648
        %v668 = vcombine.high %v616, %v648
        %v669 = vcombine.low %v625, %v657
        %v670 = vcombine.high %v625, %v657
        %v671 = vcombine.low %v632, %v664
        %v672 = vcombine.high %v632, %v664
        %v673 = vld [vmem:[%s4] sm:$0xff]
        %v674 = vld [vmem:[%s4 + $0x8] sm:$0xff]
        %vm675 = vcmask 130048
        %v677 = vsel %vm675, %v529, 0
        %v680 = vsel %vm675, %v665, 0
        %v683 = vsel %vm675, %v530, 0
        %v686 = vsel %vm675, %v666, 0
        %v689 = vsel %vm675, %v531, 0
        %v692 = vsel %vm675, %v667, 0
        %v695 = vsel %vm675, %v532, 0
        %v698 = vsel %vm675, %v668, 0
        %v701 = vsel %vm675, %v533, 0
        %v704 = vsel %vm675, %v669, 0
        %v707 = vsel %vm675, %v534, 0
        %v710 = vsel %vm675, %v670, 0
        %v713 = vsel %vm675, %v535, 0
        %v716 = vsel %vm675, %v671, 0
        %v719 = vsel %vm675, %v536, 0
        %v722 = vsel %vm675, %v672, 0
        %724 = vmatprep.subr.mxu0 0.0
        %725 = vmatpush1.msra.mxu0 0.0
        %726 = vmatprep.subr.mxu0 0.0
        %727 = vmatpush1.msra.mxu0 0.0
        %728 = vmatprep.subr.mxu0 0.0
        %729 = vmatpush1.msra.mxu0 0.0
        %730 = vmatprep.subr.mxu0 0.0
        %731 = vmatpush1.msra.mxu0 0.0
        %732 = vmatprep.subr.mxu0 0.0
        %733 = vmatpush1.msra.mxu0 0.0
        %734 = vmatprep.subr.mxu0 0.0
        %735 = vmatpush1.msra.mxu0 0.0
        %736 = vmatprep.subr.mxu0 0.0
        %737 = vmatpush1.msra.mxu0 0.0
        %738 = vmatprep.subr.mxu0 0.0
        %739 = vmatpush1.msra.mxu0 0.0
        %740 = vmatprep.subr.mxu0 0.0
        %741 = vmatpush1.msra.mxu0 0.0
        %742 = vmatprep.subr.mxu0 0.0
        %743 = vmatpush1.msra.mxu0 0.0
        %744 = vmatprep.subr.mxu0 0.0
        %745 = vmatpush1.msra.mxu0 0.0
        %746 = vmatprep.subr.mxu0 0.0
        %747 = vmatpush1.msra.mxu0 0.0
        %748 = vmatprep.subr.mxu0 0.0
        %749 = vmatpush1.msra.mxu0 0.0
        %750 = vmatprep.subr.mxu0 0.0
        %751 = vmatpush1.msra.mxu0 0.0
        %752 = vmatprep.subr.mxu0 0.0
        %753 = vmatpush1.msra.mxu0 %v674
        %754 = vmatprep.subr.mxu0 0.0
        %755 = vmatpush1.msra.mxu0 %v673
        %756 = vmatprep.subr.mxu0 0.0
        %757 = vmatpush2.msra.mxu0 0.0
        %758 = vmatprep.subr.mxu0 0.0
        %759 = vmatpush2.msra.mxu0 0.0
        %760 = vmatprep.subr.mxu0 0.0
        %761 = vmatpush2.msra.mxu0 0.0
        %762 = vmatprep.subr.mxu0 0.0
        %763 = vmatpush2.msra.mxu0 0.0
        %764 = vmatprep.subr.mxu0 0.0
        %765 = vmatpush2.msra.mxu0 0.0
        %766 = vmatprep.subr.mxu0 0.0
        %767 = vmatpush2.msra.mxu0 0.0
        %768 = vmatprep.subr.mxu0 0.0
        %769 = vmatpush2.msra.mxu0 0.0
        %770 = vmatprep.subr.mxu0 0.0
        %771 = vmatpush2.msra.mxu0 0.0
        %772 = vmatprep.subr.mxu0 0.0
        %773 = vmatpush2.msra.mxu0 0.0
        %774 = vmatprep.subr.mxu0 0.0
        %775 = vmatpush2.msra.mxu0 0.0
        %776 = vmatprep.subr.mxu0 0.0
        %777 = vmatpush2.msra.mxu0 0.0
        %778 = vmatprep.subr.mxu0 0.0
        %779 = vmatpush2.msra.mxu0 0.0
        %780 = vmatprep.subr.mxu0 0.0
        %781 = vmatpush2.msra.mxu0 0.0
        %782 = vmatprep.subr.mxu0 0.0
        %783 = vmatpush2.msra.mxu0 0.0
        %784 = vmatprep.subr.mxu0 0.0
        %785 = vmatpush2.msra.mxu0 0.0
        %786 = vmatprep.subr.mxu0 0.0
        %787 = vmatpush2.msra.mxu0 0.0
        %788 = vmatprep.mubr.f32.mxu0 0.0
        %789 = vmatmul.mubr.f32.gmra.mxu0 %v677
        %v790 = vpop.f32.mrf.mxu0
        %v791 = vadd.f32 0.0, %v790
        %v792 = vpop.f32.mrf.mxu0
        %793 = vmatprep.mubr.f32.mxu0 0.0
        %794 = vmatmul.mubr.f32.gmra.mxu0 %v680
        %v795 = vpop.f32.mrf.mxu0
        %v796 = vadd.f32 0.0, %v795
        %v797 = vpop.f32.mrf.mxu0
        %798 = vmatprep.mubr.f32.mxu0 0.0
        %799 = vmatmul.mubr.f32.gmra.mxu0 %v683
        %v800 = vpop.f32.mrf.mxu0
        %v801 = vadd.f32 0.0, %v800
        %v802 = vpop.f32.mrf.mxu0
        %803 = vmatprep.mubr.f32.mxu0 0.0
        %804 = vmatmul.mubr.f32.gmra.mxu0 %v686
        %v805 = vpop.f32.mrf.mxu0
        %v806 = vadd.f32 0.0, %v805
        %v807 = vpop.f32.mrf.mxu0
        %808 = vmatprep.mubr.f32.mxu0 0.0
        %809 = vmatmul.mubr.f32.gmra.mxu0 %v689
        %v810 = vpop.f32.mrf.mxu0
        %v811 = vadd.f32 0.0, %v810
        %v812 = vpop.f32.mrf.mxu0
        %813 = vmatprep.mubr.f32.mxu0 0.0
        %814 = vmatmul.mubr.f32.gmra.mxu0 %v692
        %v815 = vpop.f32.mrf.mxu0
        %v816 = vadd.f32 0.0, %v815
        %v817 = vpop.f32.mrf.mxu0
        %818 = vmatprep.mubr.f32.mxu0 0.0
        %819 = vmatmul.mubr.f32.gmra.mxu0 %v695
        %v820 = vpop.f32.mrf.mxu0
        %v821 = vadd.f32 0.0, %v820
        %v822 = vpop.f32.mrf.mxu0
        %823 = vmatprep.mubr.f32.mxu0 0.0
        %824 = vmatmul.mubr.f32.gmra.mxu0 %v698
        %v825 = vpop.f32.mrf.mxu0
        %v826 = vadd.f32 0.0, %v825
        %v827 = vpop.f32.mrf.mxu0
        %828 = vmatprep.mubr.f32.mxu0 0.0
        %829 = vmatmul.mubr.f32.gmra.mxu0 %v701
        %v830 = vpop.f32.mrf.mxu0
        %v831 = vadd.f32 0.0, %v830
        %v832 = vpop.f32.mrf.mxu0
        %833 = vmatprep.mubr.f32.mxu0 0.0
        %834 = vmatmul.mubr.f32.gmra.mxu0 %v704
        %v835 = vpop.f32.mrf.mxu0
        %v836 = vadd.f32 0.0, %v835
        %v837 = vpop.f32.mrf.mxu0
        %838 = vmatprep.mubr.f32.mxu0 0.0
        %839 = vmatmul.mubr.f32.gmra.mxu0 %v707
        %v840 = vpop.f32.mrf.mxu0
        %v841 = vadd.f32 0.0, %v840
        %v842 = vpop.f32.mrf.mxu0
        %843 = vmatprep.mubr.f32.mxu0 0.0
        %844 = vmatmul.mubr.f32.gmra.mxu0 %v710
        %v845 = vpop.f32.mrf.mxu0
        %v846 = vadd.f32 0.0, %v845
        %v847 = vpop.f32.mrf.mxu0
        %848 = vmatprep.mubr.f32.mxu0 0.0
        %849 = vmatmul.mubr.f32.gmra.mxu0 %v713
        %v850 = vpop.f32.mrf.mxu0
        %v851 = vadd.f32 0.0, %v850
        %v852 = vpop.f32.mrf.mxu0
        %853 = vmatprep.mubr.f32.mxu0 0.0
        %854 = vmatmul.mubr.f32.gmra.mxu0 %v716
        %v855 = vpop.f32.mrf.mxu0
        %v856 = vadd.f32 0.0, %v855
        %v857 = vpop.f32.mrf.mxu0
        %858 = vmatprep.mubr.f32.mxu0 0.0
        %859 = vmatmul.mubr.f32.gmra.mxu0 %v719
        %v860 = vpop.f32.mrf.mxu0
        %v861 = vadd.f32 0.0, %v860
        %v862 = vpop.f32.mrf.mxu0
        %863 = vmatprep.mubr.f32.mxu0 0.0
        %864 = vmatmul.mubr.f32.gmra.mxu0 %v722
        %v865 = vpop.f32.mrf.mxu0
        %v866 = vadd.f32 0.0, %v865
        %v867 = vpop.f32.mrf.mxu0
        %868 = vdwg.mxu0
        %v869 = vld [vmem:[%s3] sm:$0xff]
        %v870 = vld [vmem:[%s3 + $0x8] sm:$0xff]
        %v871 = vld [vmem:[%s3 + $0x10] sm:$0xff]
        %v872 = vld [vmem:[%s3 + $0x18] sm:$0xff]
        %v874 = vsel %vm675, %v869, 0
        %v877 = vsel %vm675, %v870, 0
        %v880 = vsel %vm675, %v871, 0
        %v883 = vsel %vm675, %v872, 0
        %885 = vmatprep.subr.mxu0 0.0
        %886 = vmatpush1.msra.mxu0 0.0
        %887 = vmatprep.subr.mxu0 0.0
        %888 = vmatpush1.msra.mxu0 0.0
        %889 = vmatprep.subr.mxu0 0.0
        %890 = vmatpush1.msra.mxu0 0.0
        %891 = vmatprep.subr.mxu0 0.0
        %892 = vmatpush1.msra.mxu0 0.0
        %893 = vmatprep.subr.mxu0 0.0
        %894 = vmatpush1.msra.mxu0 0.0
        %895 = vmatprep.subr.mxu0 0.0
        %896 = vmatpush1.msra.mxu0 0.0
        %897 = vmatprep.subr.mxu0 0.0
        %898 = vmatpush1.msra.mxu0 0.0
        %899 = vmatprep.subr.mxu0 0.0
        %900 = vmatpush1.msra.mxu0 0.0
        %901 = vmatprep.subr.mxu0 0.0
        %902 = vmatpush1.msra.mxu0 0.0
        %903 = vmatprep.subr.mxu0 0.0
        %904 = vmatpush1.msra.mxu0 0.0
        %905 = vmatprep.subr.mxu0 0.0
        %906 = vmatpush1.msra.mxu0 0.0
        %907 = vmatprep.subr.mxu0 0.0
        %908 = vmatpush1.msra.mxu0 0.0
        %909 = vmatprep.subr.mxu0 0.0
        %910 = vmatpush1.msra.mxu0 0.0
        %911 = vmatprep.subr.mxu0 0.0
        %912 = vmatpush1.msra.mxu0 0.0
        %913 = vmatprep.subr.mxu0 0.0
        %914 = vmatpush1.msra.mxu0 %v796
        %915 = vmatprep.subr.mxu0 0.0
        %916 = vmatpush1.msra.mxu0 %v791
        %917 = vmatprep.subr.mxu0 0.0
        %918 = vmatpush2.msra.mxu0 0.0
        %919 = vmatprep.subr.mxu0 0.0
        %920 = vmatpush2.msra.mxu0 0.0
        %921 = vmatprep.subr.mxu0 0.0
        %922 = vmatpush2.msra.mxu0 0.0
        %923 = vmatprep.subr.mxu0 0.0
        %924 = vmatpush2.msra.mxu0 0.0
        %925 = vmatprep.subr.mxu0 0.0
        %926 = vmatpush2.msra.mxu0 0.0
        %927 = vmatprep.subr.mxu0 0.0
        %928 = vmatpush2.msra.mxu0 0.0
        %929 = vmatprep.subr.mxu0 0.0
        %930 = vmatpush2.msra.mxu0 0.0
        %931 = vmatprep.subr.mxu0 0.0
        %932 = vmatpush2.msra.mxu0 0.0
        %933 = vmatprep.subr.mxu0 0.0
        %934 = vmatpush2.msra.mxu0 0.0
        %935 = vmatprep.subr.mxu0 0.0
        %936 = vmatpush2.msra.mxu0 0.0
        %937 = vmatprep.subr.mxu0 0.0
        %938 = vmatpush2.msra.mxu0 0.0
        %939 = vmatprep.subr.mxu0 0.0
        %940 = vmatpush2.msra.mxu0 0.0
        %941 = vmatprep.subr.mxu0 0.0
        %942 = vmatpush2.msra.mxu0 0.0
        %943 = vmatprep.subr.mxu0 0.0
        %944 = vmatpush2.msra.mxu0 0.0
        %945 = vmatprep.subr.mxu0 0.0
        %946 = vmatpush2.msra.mxu0 0.0
        %947 = vmatprep.subr.mxu0 0.0
        %948 = vmatpush2.msra.mxu0 0.0
        %949 = vmatprep.mubr.f32.mxu0 0.0
        %950 = vmatmul.mubr.f32.gmra.mxu0 %v874
        %v951 = vpop.f32.mrf.mxu0
        %v952 = vadd.f32 0.0, %v951
        %v953 = vpop.f32.mrf.mxu0
        %954 = vmatprep.mubr.f32.mxu0 0.0
        %955 = vmatmul.mubr.f32.gmra.mxu0 %v877
        %v956 = vpop.f32.mrf.mxu0
        %v957 = vadd.f32 0.0, %v956
        %v958 = vpop.f32.mrf.mxu0
        %959 = vmatprep.mubr.f32.mxu0 0.0
        %960 = vmatmul.mubr.f32.gmra.mxu0 %v880
        %v961 = vpop.f32.mrf.mxu0
        %v962 = vadd.f32 0.0, %v961
        %v963 = vpop.f32.mrf.mxu0
        %964 = vmatprep.mubr.f32.mxu0 0.0
        %965 = vmatmul.mubr.f32.gmra.mxu0 %v883
        %v966 = vpop.f32.mrf.mxu0
        %v967 = vadd.f32 0.0, %v966
        %v968 = vpop.f32.mrf.mxu0
        %969 = vdwg.mxu0
        %970 = vmatprep.subr.mxu0 0.0
        %971 = vmatpush1.msra.mxu0 0.0
        %972 = vmatprep.subr.mxu0 0.0
        %973 = vmatpush1.msra.mxu0 0.0
        %974 = vmatprep.subr.mxu0 0.0
        %975 = vmatpush1.msra.mxu0 0.0
        %976 = vmatprep.subr.mxu0 0.0
        %977 = vmatpush1.msra.mxu0 0.0
        %978 = vmatprep.subr.mxu0 0.0
        %979 = vmatpush1.msra.mxu0 0.0
        %980 = vmatprep.subr.mxu0 0.0
        %981 = vmatpush1.msra.mxu0 0.0
        %982 = vmatprep.subr.mxu0 0.0
        %983 = vmatpush1.msra.mxu0 0.0
        %984 = vmatprep.subr.mxu0 0.0
        %985 = vmatpush1.msra.mxu0 0.0
        %986 = vmatprep.subr.mxu0 0.0
        %987 = vmatpush1.msra.mxu0 0.0
        %988 = vmatprep.subr.mxu0 0.0
        %989 = vmatpush1.msra.mxu0 0.0
        %990 = vmatprep.subr.mxu0 0.0
        %991 = vmatpush1.msra.mxu0 0.0
        %992 = vmatprep.subr.mxu0 0.0
        %993 = vmatpush1.msra.mxu0 0.0
        %994 = vmatprep.subr.mxu0 0.0
        %995 = vmatpush1.msra.mxu0 0.0
        %996 = vmatprep.subr.mxu0 0.0
        %997 = vmatpush1.msra.mxu0 0.0
        %998 = vmatprep.subr.mxu0 0.0
        %999 = vmatpush1.msra.mxu0 %v806
        %1000 = vmatprep.subr.mxu0 0.0
        %1001 = vmatpush1.msra.mxu0 %v801
        %1002 = vmatprep.subr.mxu0 0.0
        %1003 = vmatpush2.msra.mxu0 0.0
        %1004 = vmatprep.subr.mxu0 0.0
        %1005 = vmatpush2.msra.mxu0 0.0
        %1006 = vmatprep.subr.mxu0 0.0
        %1007 = vmatpush2.msra.mxu0 0.0
        %1008 = vmatprep.subr.mxu0 0.0
        %1009 = vmatpush2.msra.mxu0 0.0
        %1010 = vmatprep.subr.mxu0 0.0
        %1011 = vmatpush2.msra.mxu0 0.0
        %1012 = vmatprep.subr.mxu0 0.0
        %1013 = vmatpush2.msra.mxu0 0.0
        %1014 = vmatprep.subr.mxu0 0.0
        %1015 = vmatpush2.msra.mxu0 0.0
        %1016 = vmatprep.subr.mxu0 0.0
        %1017 = vmatpush2.msra.mxu0 0.0
        %1018 = vmatprep.subr.mxu0 0.0
        %1019 = vmatpush2.msra.mxu0 0.0
        %1020 = vmatprep.subr.mxu0 0.0
        %1021 = vmatpush2.msra.mxu0 0.0
        %1022 = vmatprep.subr.mxu0 0.0
        %1023 = vmatpush2.msra.mxu0 0.0
        %1024 = vmatprep.subr.mxu0 0.0
        %1025 = vmatpush2.msra.mxu0 0.0
        %1026 = vmatprep.subr.mxu0 0.0
        %1027 = vmatpush2.msra.mxu0 0.0
        %1028 = vmatprep.subr.mxu0 0.0
        %1029 = vmatpush2.msra.mxu0 0.0
        %1030 = vmatprep.subr.mxu0 0.0
        %1031 = vmatpush2.msra.mxu0 0.0
        %1032 = vmatprep.subr.mxu0 0.0
        %1033 = vmatpush2.msra.mxu0 0.0
        %1034 = vmatprep.mubr.f32.mxu0 0.0
        %1035 = vmatmul.mubr.f32.gmra.mxu0 %v874
        %v1036 = vpop.f32.mrf.mxu0
        %v1037 = vadd.f32 0.0, %v1036
        %v1038 = vpop.f32.mrf.mxu0
        %1039 = vmatprep.mubr.f32.mxu0 0.0
        %1040 = vmatmul.mubr.f32.gmra.mxu0 %v877
        %v1041 = vpop.f32.mrf.mxu0
        %v1042 = vadd.f32 0.0, %v1041
        %v1043 = vpop.f32.mrf.mxu0
        %1044 = vmatprep.mubr.f32.mxu0 0.0
        %1045 = vmatmul.mubr.f32.gmra.mxu0 %v880
        %v1046 = vpop.f32.mrf.mxu0
        %v1047 = vadd.f32 0.0, %v1046
        %v1048 = vpop.f32.mrf.mxu0
        %1049 = vmatprep.mubr.f32.mxu0 0.0
        %1050 = vmatmul.mubr.f32.gmra.mxu0 %v883
        %v1051 = vpop.f32.mrf.mxu0
        %v1052 = vadd.f32 0.0, %v1051
        %v1053 = vpop.f32.mrf.mxu0
        %1054 = vdwg.mxu0
        %1055 = vmatprep.subr.mxu0 0.0
        %1056 = vmatpush1.msra.mxu0 0.0
        %1057 = vmatprep.subr.mxu0 0.0
        %1058 = vmatpush1.msra.mxu0 0.0
        %1059 = vmatprep.subr.mxu0 0.0
        %1060 = vmatpush1.msra.mxu0 0.0
        %1061 = vmatprep.subr.mxu0 0.0
        %1062 = vmatpush1.msra.mxu0 0.0
        %1063 = vmatprep.subr.mxu0 0.0
        %1064 = vmatpush1.msra.mxu0 0.0
        %1065 = vmatprep.subr.mxu0 0.0
        %1066 = vmatpush1.msra.mxu0 0.0
        %1067 = vmatprep.subr.mxu0 0.0
        %1068 = vmatpush1.msra.mxu0 0.0
        %1069 = vmatprep.subr.mxu0 0.0
        %1070 = vmatpush1.msra.mxu0 0.0
        %1071 = vmatprep.subr.mxu0 0.0
        %1072 = vmatpush1.msra.mxu0 0.0
        %1073 = vmatprep.subr.mxu0 0.0
        %1074 = vmatpush1.msra.mxu0 0.0
        %1075 = vmatprep.subr.mxu0 0.0
        %1076 = vmatpush1.msra.mxu0 0.0
        %1077 = vmatprep.subr.mxu0 0.0
        %1078 = vmatpush1.msra.mxu0 0.0
        %1079 = vmatprep.subr.mxu0 0.0
        %1080 = vmatpush1.msra.mxu0 0.0
        %1081 = vmatprep.subr.mxu0 0.0
        %1082 = vmatpush1.msra.mxu0 0.0
        %1083 = vmatprep.subr.mxu0 0.0
        %1084 = vmatpush1.msra.mxu0 %v816
        %1085 = vmatprep.subr.mxu0 0.0
        %1086 = vmatpush1.msra.mxu0 %v811
        %1087 = vmatprep.subr.mxu0 0.0
        %1088 = vmatpush2.msra.mxu0 0.0
        %1089 = vmatprep.subr.mxu0 0.0
        %1090 = vmatpush2.msra.mxu0 0.0
        %1091 = vmatprep.subr.mxu0 0.0
        %1092 = vmatpush2.msra.mxu0 0.0
        %1093 = vmatprep.subr.mxu0 0.0
        %1094 = vmatpush2.msra.mxu0 0.0
        %1095 = vmatprep.subr.mxu0 0.0
        %1096 = vmatpush2.msra.mxu0 0.0
        %1097 = vmatprep.subr.mxu0 0.0
        %1098 = vmatpush2.msra.mxu0 0.0
        %1099 = vmatprep.subr.mxu0 0.0
        %1100 = vmatpush2.msra.mxu0 0.0
        %1101 = vmatprep.subr.mxu0 0.0
        %1102 = vmatpush2.msra.mxu0 0.0
        %1103 = vmatprep.subr.mxu0 0.0
        %1104 = vmatpush2.msra.mxu0 0.0
        %1105 = vmatprep.subr.mxu0 0.0
        %1106 = vmatpush2.msra.mxu0 0.0
        %1107 = vmatprep.subr.mxu0 0.0
        %1108 = vmatpush2.msra.mxu0 0.0
        %1109 = vmatprep.subr.mxu0 0.0
        %1110 = vmatpush2.msra.mxu0 0.0
        %1111 = vmatprep.subr.mxu0 0.0
        %1112 = vmatpush2.msra.mxu0 0.0
        %1113 = vmatprep.subr.mxu0 0.0
        %1114 = vmatpush2.msra.mxu0 0.0
        %1115 = vmatprep.subr.mxu0 0.0
        %1116 = vmatpush2.msra.mxu0 0.0
        %1117 = vmatprep.subr.mxu0 0.0
        %1118 = vmatpush2.msra.mxu0 0.0
        %1119 = vmatprep.mubr.f32.mxu0 0.0
        %1120 = vmatmul.mubr.f32.gmra.mxu0 %v874
        %v1121 = vpop.f32.mrf.mxu0
        %v1122 = vadd.f32 0.0, %v1121
        %v1123 = vpop.f32.mrf.mxu0
        %1124 = vmatprep.mubr.f32.mxu0 0.0
        %1125 = vmatmul.mubr.f32.gmra.mxu0 %v877
        %v1126 = vpop.f32.mrf.mxu0
        %v1127 = vadd.f32 0.0, %v1126
        %v1128 = vpop.f32.mrf.mxu0
        %1129 = vmatprep.mubr.f32.mxu0 0.0
        %1130 = vmatmul.mubr.f32.gmra.mxu0 %v880
        %v1131 = vpop.f32.mrf.mxu0
        %v1132 = vadd.f32 0.0, %v1131
        %v1133 = vpop.f32.mrf.mxu0
        %1134 = vmatprep.mubr.f32.mxu0 0.0
        %1135 = vmatmul.mubr.f32.gmra.mxu0 %v883
        %v1136 = vpop.f32.mrf.mxu0
        %v1137 = vadd.f32 0.0, %v1136
        %v1138 = vpop.f32.mrf.mxu0
        %1139 = vdwg.mxu0
        %1140 = vmatprep.subr.mxu0 0.0
        %1141 = vmatpush1.msra.mxu0 0.0
        %1142 = vmatprep.subr.mxu0 0.0
        %1143 = vmatpush1.msra.mxu0 0.0
        %1144 = vmatprep.subr.mxu0 0.0
        %1145 = vmatpush1.msra.mxu0 0.0
        %1146 = vmatprep.subr.mxu0 0.0
        %1147 = vmatpush1.msra.mxu0 0.0
        %1148 = vmatprep.subr.mxu0 0.0
        %1149 = vmatpush1.msra.mxu0 0.0
        %1150 = vmatprep.subr.mxu0 0.0
        %1151 = vmatpush1.msra.mxu0 0.0
        %1152 = vmatprep.subr.mxu0 0.0
        %1153 = vmatpush1.msra.mxu0 0.0
        %1154 = vmatprep.subr.mxu0 0.0
        %1155 = vmatpush1.msra.mxu0 0.0
        %1156 = vmatprep.subr.mxu0 0.0
        %1157 = vmatpush1.msra.mxu0 0.0
        %1158 = vmatprep.subr.mxu0 0.0
        %1159 = vmatpush1.msra.mxu0 0.0
        %1160 = vmatprep.subr.mxu0 0.0
        %1161 = vmatpush1.msra.mxu0 0.0
        %1162 = vmatprep.subr.mxu0 0.0
        %1163 = vmatpush1.msra.mxu0 0.0
        %1164 = vmatprep.subr.mxu0 0.0
        %1165 = vmatpush1.msra.mxu0 0.0
        %1166 = vmatprep.subr.mxu0 0.0
        %1167 = vmatpush1.msra.mxu0 0.0
        %1168 = vmatprep.subr.mxu0 0.0
        %1169 = vmatpush1.msra.mxu0 %v826
        %1170 = vmatprep.subr.mxu0 0.0
        %1171 = vmatpush1.msra.mxu0 %v821
        %1172 = vmatprep.subr.mxu0 0.0
        %1173 = vmatpush2.msra.mxu0 0.0
        %1174 = vmatprep.subr.mxu0 0.0
        %1175 = vmatpush2.msra.mxu0 0.0
        %1176 = vmatprep.subr.mxu0 0.0
        %1177 = vmatpush2.msra.mxu0 0.0
        %1178 = vmatprep.subr.mxu0 0.0
        %1179 = vmatpush2.msra.mxu0 0.0
        %1180 = vmatprep.subr.mxu0 0.0
        %1181 = vmatpush2.msra.mxu0 0.0
        %1182 = vmatprep.subr.mxu0 0.0
        %1183 = vmatpush2.msra.mxu0 0.0
        %1184 = vmatprep.subr.mxu0 0.0
        %1185 = vmatpush2.msra.mxu0 0.0
        %1186 = vmatprep.subr.mxu0 0.0
        %1187 = vmatpush2.msra.mxu0 0.0
        %1188 = vmatprep.subr.mxu0 0.0
        %1189 = vmatpush2.msra.mxu0 0.0
        %1190 = vmatprep.subr.mxu0 0.0
        %1191 = vmatpush2.msra.mxu0 0.0
        %1192 = vmatprep.subr.mxu0 0.0
        %1193 = vmatpush2.msra.mxu0 0.0
        %1194 = vmatprep.subr.mxu0 0.0
        %1195 = vmatpush2.msra.mxu0 0.0
        %1196 = vmatprep.subr.mxu0 0.0
        %1197 = vmatpush2.msra.mxu0 0.0
        %1198 = vmatprep.subr.mxu0 0.0
        %1199 = vmatpush2.msra.mxu0 0.0
        %1200 = vmatprep.subr.mxu0 0.0
        %1201 = vmatpush2.msra.mxu0 0.0
        %1202 = vmatprep.subr.mxu0 0.0
        %1203 = vmatpush2.msra.mxu0 0.0
        %1204 = vmatprep.mubr.f32.mxu0 0.0
        %1205 = vmatmul.mubr.f32.gmra.mxu0 %v874
        %v1206 = vpop.f32.mrf.mxu0
        %v1207 = vadd.f32 0.0, %v1206
        %v1208 = vpop.f32.mrf.mxu0
        %1209 = vmatprep.mubr.f32.mxu0 0.0
        %1210 = vmatmul.mubr.f32.gmra.mxu0 %v877
        %v1211 = vpop.f32.mrf.mxu0
        %v1212 = vadd.f32 0.0, %v1211
        %v1213 = vpop.f32.mrf.mxu0
        %1214 = vmatprep.mubr.f32.mxu0 0.0
        %1215 = vmatmul.mubr.f32.gmra.mxu0 %v880
        %v1216 = vpop.f32.mrf.mxu0
        %v1217 = vadd.f32 0.0, %v1216
        %v1218 = vpop.f32.mrf.mxu0
        %1219 = vmatprep.mubr.f32.mxu0 0.0
        %1220 = vmatmul.mubr.f32.gmra.mxu0 %v883
        %v1221 = vpop.f32.mrf.mxu0
        %v1222 = vadd.f32 0.0, %v1221
        %v1223 = vpop.f32.mrf.mxu0
        %1224 = vdwg.mxu0
        %1225 = vmatprep.subr.mxu0 0.0
        %1226 = vmatpush1.msra.mxu0 0.0
        %1227 = vmatprep.subr.mxu0 0.0
        %1228 = vmatpush1.msra.mxu0 0.0
        %1229 = vmatprep.subr.mxu0 0.0
        %1230 = vmatpush1.msra.mxu0 0.0
        %1231 = vmatprep.subr.mxu0 0.0
        %1232 = vmatpush1.msra.mxu0 0.0
        %1233 = vmatprep.subr.mxu0 0.0
        %1234 = vmatpush1.msra.mxu0 0.0
        %1235 = vmatprep.subr.mxu0 0.0
        %1236 = vmatpush1.msra.mxu0 0.0
        %1237 = vmatprep.subr.mxu0 0.0
        %1238 = vmatpush1.msra.mxu0 0.0
        %1239 = vmatprep.subr.mxu0 0.0
        %1240 = vmatpush1.msra.mxu0 0.0
        %1241 = vmatprep.subr.mxu0 0.0
        %1242 = vmatpush1.msra.mxu0 0.0
        %1243 = vmatprep.subr.mxu0 0.0
        %1244 = vmatpush1.msra.mxu0 0.0
        %1245 = vmatprep.subr.mxu0 0.0
        %1246 = vmatpush1.msra.mxu0 0.0
        %1247 = vmatprep.subr.mxu0 0.0
        %1248 = vmatpush1.msra.mxu0 0.0
        %1249 = vmatprep.subr.mxu0 0.0
        %1250 = vmatpush1.msra.mxu0 0.0
        %1251 = vmatprep.subr.mxu0 0.0
        %1252 = vmatpush1.msra.mxu0 0.0
        %1253 = vmatprep.subr.mxu0 0.0
        %1254 = vmatpush1.msra.mxu0 %v836
        %1255 = vmatprep.subr.mxu0 0.0
        %1256 = vmatpush1.msra.mxu0 %v831
        %1257 = vmatprep.subr.mxu0 0.0
        %1258 = vmatpush2.msra.mxu0 0.0
        %1259 = vmatprep.subr.mxu0 0.0
        %1260 = vmatpush2.msra.mxu0 0.0
        %1261 = vmatprep.subr.mxu0 0.0
        %1262 = vmatpush2.msra.mxu0 0.0
        %1263 = vmatprep.subr.mxu0 0.0
        %1264 = vmatpush2.msra.mxu0 0.0
        %1265 = vmatprep.subr.mxu0 0.0
        %1266 = vmatpush2.msra.mxu0 0.0
        %1267 = vmatprep.subr.mxu0 0.0
        %1268 = vmatpush2.msra.mxu0 0.0
        %1269 = vmatprep.subr.mxu0 0.0
        %1270 = vmatpush2.msra.mxu0 0.0
        %1271 = vmatprep.subr.mxu0 0.0
        %1272 = vmatpush2.msra.mxu0 0.0
        %1273 = vmatprep.subr.mxu0 0.0
        %1274 = vmatpush2.msra.mxu0 0.0
        %1275 = vmatprep.subr.mxu0 0.0
        %1276 = vmatpush2.msra.mxu0 0.0
        %1277 = vmatprep.subr.mxu0 0.0
        %1278 = vmatpush2.msra.mxu0 0.0
        %1279 = vmatprep.subr.mxu0 0.0
        %1280 = vmatpush2.msra.mxu0 0.0
        %1281 = vmatprep.subr.mxu0 0.0
        %1282 = vmatpush2.msra.mxu0 0.0
        %1283 = vmatprep.subr.mxu0 0.0
        %1284 = vmatpush2.msra.mxu0 0.0
        %1285 = vmatprep.subr.mxu0 0.0
        %1286 = vmatpush2.msra.mxu0 0.0
        %1287 = vmatprep.subr.mxu0 0.0
        %1288 = vmatpush2.msra.mxu0 0.0
        %1289 = vmatprep.mubr.f32.mxu0 0.0
        %1290 = vmatmul.mubr.f32.gmra.mxu0 %v874
        %v1291 = vpop.f32.mrf.mxu0
        %v1292 = vadd.f32 0.0, %v1291
        %v1293 = vpop.f32.mrf.mxu0
        %1294 = vmatprep.mubr.f32.mxu0 0.0
        %1295 = vmatmul.mubr.f32.gmra.mxu0 %v877
        %v1296 = vpop.f32.mrf.mxu0
        %v1297 = vadd.f32 0.0, %v1296
        %v1298 = vpop.f32.mrf.mxu0
        %1299 = vmatprep.mubr.f32.mxu0 0.0
        %1300 = vmatmul.mubr.f32.gmra.mxu0 %v880
        %v1301 = vpop.f32.mrf.mxu0
        %v1302 = vadd.f32 0.0, %v1301
        %v1303 = vpop.f32.mrf.mxu0
        %1304 = vmatprep.mubr.f32.mxu0 0.0
        %1305 = vmatmul.mubr.f32.gmra.mxu0 %v883
        %v1306 = vpop.f32.mrf.mxu0
        %v1307 = vadd.f32 0.0, %v1306
        %v1308 = vpop.f32.mrf.mxu0
        %1309 = vdwg.mxu0
        %1310 = vmatprep.subr.mxu0 0.0
        %1311 = vmatpush1.msra.mxu0 0.0
        %1312 = vmatprep.subr.mxu0 0.0
        %1313 = vmatpush1.msra.mxu0 0.0
        %1314 = vmatprep.subr.mxu0 0.0
        %1315 = vmatpush1.msra.mxu0 0.0
        %1316 = vmatprep.subr.mxu0 0.0
        %1317 = vmatpush1.msra.mxu0 0.0
        %1318 = vmatprep.subr.mxu0 0.0
        %1319 = vmatpush1.msra.mxu0 0.0
        %1320 = vmatprep.subr.mxu0 0.0
        %1321 = vmatpush1.msra.mxu0 0.0
        %1322 = vmatprep.subr.mxu0 0.0
        %1323 = vmatpush1.msra.mxu0 0.0
        %1324 = vmatprep.subr.mxu0 0.0
        %1325 = vmatpush1.msra.mxu0 0.0
        %1326 = vmatprep.subr.mxu0 0.0
        %1327 = vmatpush1.msra.mxu0 0.0
        %1328 = vmatprep.subr.mxu0 0.0
        %1329 = vmatpush1.msra.mxu0 0.0
        %1330 = vmatprep.subr.mxu0 0.0
        %1331 = vmatpush1.msra.mxu0 0.0
        %1332 = vmatprep.subr.mxu0 0.0
        %1333 = vmatpush1.msra.mxu0 0.0
        %1334 = vmatprep.subr.mxu0 0.0
        %1335 = vmatpush1.msra.mxu0 0.0
        %1336 = vmatprep.subr.mxu0 0.0
        %1337 = vmatpush1.msra.mxu0 0.0
        %1338 = vmatprep.subr.mxu0 0.0
        %1339 = vmatpush1.msra.mxu0 %v846
        %1340 = vmatprep.subr.mxu0 0.0
        %1341 = vmatpush1.msra.mxu0 %v841
        %1342 = vmatprep.subr.mxu0 0.0
        %1343 = vmatpush2.msra.mxu0 0.0
        %1344 = vmatprep.subr.mxu0 0.0
        %1345 = vmatpush2.msra.mxu0 0.0
        %1346 = vmatprep.subr.mxu0 0.0
        %1347 = vmatpush2.msra.mxu0 0.0
        %1348 = vmatprep.subr.mxu0 0.0
        %1349 = vmatpush2.msra.mxu0 0.0
        %1350 = vmatprep.subr.mxu0 0.0
        %1351 = vmatpush2.msra.mxu0 0.0
        %1352 = vmatprep.subr.mxu0 0.0
        %1353 = vmatpush2.msra.mxu0 0.0
        %1354 = vmatprep.subr.mxu0 0.0
        %1355 = vmatpush2.msra.mxu0 0.0
        %1356 = vmatprep.subr.mxu0 0.0
        %1357 = vmatpush2.msra.mxu0 0.0
        %1358 = vmatprep.subr.mxu0 0.0
        %1359 = vmatpush2.msra.mxu0 0.0
        %1360 = vmatprep.subr.mxu0 0.0
        %1361 = vmatpush2.msra.mxu0 0.0
        %1362 = vmatprep.subr.mxu0 0.0
        %1363 = vmatpush2.msra.mxu0 0.0
        %1364 = vmatprep.subr.mxu0 0.0
        %1365 = vmatpush2.msra.mxu0 0.0
        %1366 = vmatprep.subr.mxu0 0.0
        %1367 = vmatpush2.msra.mxu0 0.0
        %1368 = vmatprep.subr.mxu0 0.0
        %1369 = vmatpush2.msra.mxu0 0.0
        %1370 = vmatprep.subr.mxu0 0.0
        %1371 = vmatpush2.msra.mxu0 0.0
        %1372 = vmatprep.subr.mxu0 0.0
        %1373 = vmatpush2.msra.mxu0 0.0
        %1374 = vmatprep.mubr.f32.mxu0 0.0
        %1375 = vmatmul.mubr.f32.gmra.mxu0 %v874
        %v1376 = vpop.f32.mrf.mxu0
        %v1377 = vadd.f32 0.0, %v1376
        %v1378 = vpop.f32.mrf.mxu0
        %1379 = vmatprep.mubr.f32.mxu0 0.0
        %1380 = vmatmul.mubr.f32.gmra.mxu0 %v877
        %v1381 = vpop.f32.mrf.mxu0
        %v1382 = vadd.f32 0.0, %v1381
        %v1383 = vpop.f32.mrf.mxu0
        %1384 = vmatprep.mubr.f32.mxu0 0.0
        %1385 = vmatmul.mubr.f32.gmra.mxu0 %v880
        %v1386 = vpop.f32.mrf.mxu0
        %v1387 = vadd.f32 0.0, %v1386
        %v1388 = vpop.f32.mrf.mxu0
        %1389 = vmatprep.mubr.f32.mxu0 0.0
        %1390 = vmatmul.mubr.f32.gmra.mxu0 %v883
        %v1391 = vpop.f32.mrf.mxu0
        %v1392 = vadd.f32 0.0, %v1391
        %v1393 = vpop.f32.mrf.mxu0
        %1394 = vdwg.mxu0
        %1395 = vmatprep.subr.mxu0 0.0
        %1396 = vmatpush1.msra.mxu0 0.0
        %1397 = vmatprep.subr.mxu0 0.0
        %1398 = vmatpush1.msra.mxu0 0.0
        %1399 = vmatprep.subr.mxu0 0.0
        %1400 = vmatpush1.msra.mxu0 0.0
        %1401 = vmatprep.subr.mxu0 0.0
        %1402 = vmatpush1.msra.mxu0 0.0
        %1403 = vmatprep.subr.mxu0 0.0
        %1404 = vmatpush1.msra.mxu0 0.0
        %1405 = vmatprep.subr.mxu0 0.0
        %1406 = vmatpush1.msra.mxu0 0.0
        %1407 = vmatprep.subr.mxu0 0.0
        %1408 = vmatpush1.msra.mxu0 0.0
        %1409 = vmatprep.subr.mxu0 0.0
        %1410 = vmatpush1.msra.mxu0 0.0
        %1411 = vmatprep.subr.mxu0 0.0
        %1412 = vmatpush1.msra.mxu0 0.0
        %1413 = vmatprep.subr.mxu0 0.0
        %1414 = vmatpush1.msra.mxu0 0.0
        %1415 = vmatprep.subr.mxu0 0.0
        %1416 = vmatpush1.msra.mxu0 0.0
        %1417 = vmatprep.subr.mxu0 0.0
        %1418 = vmatpush1.msra.mxu0 0.0
        %1419 = vmatprep.subr.mxu0 0.0
        %1420 = vmatpush1.msra.mxu0 0.0
        %1421 = vmatprep.subr.mxu0 0.0
        %1422 = vmatpush1.msra.mxu0 0.0
        %1423 = vmatprep.subr.mxu0 0.0
        %1424 = vmatpush1.msra.mxu0 %v856
        %1425 = vmatprep.subr.mxu0 0.0
        %1426 = vmatpush1.msra.mxu0 %v851
        %1427 = vmatprep.subr.mxu0 0.0
        %1428 = vmatpush2.msra.mxu0 0.0
        %1429 = vmatprep.subr.mxu0 0.0
        %1430 = vmatpush2.msra.mxu0 0.0
        %1431 = vmatprep.subr.mxu0 0.0
        %1432 = vmatpush2.msra.mxu0 0.0
        %1433 = vmatprep.subr.mxu0 0.0
        %1434 = vmatpush2.msra.mxu0 0.0
        %1435 = vmatprep.subr.mxu0 0.0
        %1436 = vmatpush2.msra.mxu0 0.0
        %1437 = vmatprep.subr.mxu0 0.0
        %1438 = vmatpush2.msra.mxu0 0.0
        %1439 = vmatprep.subr.mxu0 0.0
        %1440 = vmatpush2.msra.mxu0 0.0
        %1441 = vmatprep.subr.mxu0 0.0
        %1442 = vmatpush2.msra.mxu0 0.0
        %1443 = vmatprep.subr.mxu0 0.0
        %1444 = vmatpush2.msra.mxu0 0.0
        %1445 = vmatprep.subr.mxu0 0.0
        %1446 = vmatpush2.msra.mxu0 0.0
        %1447 = vmatprep.subr.mxu0 0.0
        %1448 = vmatpush2.msra.mxu0 0.0
        %1449 = vmatprep.subr.mxu0 0.0
        %1450 = vmatpush2.msra.mxu0 0.0
        %1451 = vmatprep.subr.mxu0 0.0
        %1452 = vmatpush2.msra.mxu0 0.0
        %1453 = vmatprep.subr.mxu0 0.0
        %1454 = vmatpush2.msra.mxu0 0.0
        %1455 = vmatprep.subr.mxu0 0.0
        %1456 = vmatpush2.msra.mxu0 0.0
        %1457 = vmatprep.subr.mxu0 0.0
        %1458 = vmatpush2.msra.mxu0 0.0
        %1459 = vmatprep.mubr.f32.mxu0 0.0
        %1460 = vmatmul.mubr.f32.gmra.mxu0 %v874
        %v1461 = vpop.f32.mrf.mxu0
        %v1462 = vadd.f32 0.0, %v1461
        %v1463 = vpop.f32.mrf.mxu0
        %1464 = vmatprep.mubr.f32.mxu0 0.0
        %1465 = vmatmul.mubr.f32.gmra.mxu0 %v877
        %v1466 = vpop.f32.mrf.mxu0
        %v1467 = vadd.f32 0.0, %v1466
        %v1468 = vpop.f32.mrf.mxu0
        %1469 = vmatprep.mubr.f32.mxu0 0.0
        %1470 = vmatmul.mubr.f32.gmra.mxu0 %v880
        %v1471 = vpop.f32.mrf.mxu0
        %v1472 = vadd.f32 0.0, %v1471
        %v1473 = vpop.f32.mrf.mxu0
        %1474 = vmatprep.mubr.f32.mxu0 0.0
        %1475 = vmatmul.mubr.f32.gmra.mxu0 %v883
        %v1476 = vpop.f32.mrf.mxu0
        %v1477 = vadd.f32 0.0, %v1476
        %v1478 = vpop.f32.mrf.mxu0
        %1479 = vdwg.mxu0
        %1480 = vmatprep.subr.mxu0 0.0
        %1481 = vmatpush1.msra.mxu0 0.0
        %1482 = vmatprep.subr.mxu0 0.0
        %1483 = vmatpush1.msra.mxu0 0.0
        %1484 = vmatprep.subr.mxu0 0.0
        %1485 = vmatpush1.msra.mxu0 0.0
        %1486 = vmatprep.subr.mxu0 0.0
        %1487 = vmatpush1.msra.mxu0 0.0
        %1488 = vmatprep.subr.mxu0 0.0
        %1489 = vmatpush1.msra.mxu0 0.0
        %1490 = vmatprep.subr.mxu0 0.0
        %1491 = vmatpush1.msra.mxu0 0.0
        %1492 = vmatprep.subr.mxu0 0.0
        %1493 = vmatpush1.msra.mxu0 0.0
        %1494 = vmatprep.subr.mxu0 0.0
        %1495 = vmatpush1.msra.mxu0 0.0
        %1496 = vmatprep.subr.mxu0 0.0
        %1497 = vmatpush1.msra.mxu0 0.0
        %1498 = vmatprep.subr.mxu0 0.0
        %1499 = vmatpush1.msra.mxu0 0.0
        %1500 = vmatprep.subr.mxu0 0.0
        %1501 = vmatpush1.msra.mxu0 0.0
        %1502 = vmatprep.subr.mxu0 0.0
        %1503 = vmatpush1.msra.mxu0 0.0
        %1504 = vmatprep.subr.mxu0 0.0
        %1505 = vmatpush1.msra.mxu0 0.0
        %1506 = vmatprep.subr.mxu0 0.0
        %1507 = vmatpush1.msra.mxu0 0.0
        %1508 = vmatprep.subr.mxu0 0.0
        %1509 = vmatpush1.msra.mxu0 %v866
        %1510 = vmatprep.subr.mxu0 0.0
        %1511 = vmatpush1.msra.mxu0 %v861
        %1512 = vmatprep.subr.mxu0 0.0
        %1513 = vmatpush2.msra.mxu0 0.0
        %1514 = vmatprep.subr.mxu0 0.0
        %1515 = vmatpush2.msra.mxu0 0.0
        %1516 = vmatprep.subr.mxu0 0.0
        %1517 = vmatpush2.msra.mxu0 0.0
        %1518 = vmatprep.subr.mxu0 0.0
        %1519 = vmatpush2.msra.mxu0 0.0
        %1520 = vmatprep.subr.mxu0 0.0
        %1521 = vmatpush2.msra.mxu0 0.0
        %1522 = vmatprep.subr.mxu0 0.0
        %1523 = vmatpush2.msra.mxu0 0.0
        %1524 = vmatprep.subr.mxu0 0.0
        %1525 = vmatpush2.msra.mxu0 0.0
        %1526 = vmatprep.subr.mxu0 0.0
        %1527 = vmatpush2.msra.mxu0 0.0
        %1528 = vmatprep.subr.mxu0 0.0
        %1529 = vmatpush2.msra.mxu0 0.0
        %1530 = vmatprep.subr.mxu0 0.0
        %1531 = vmatpush2.msra.mxu0 0.0
        %1532 = vmatprep.subr.mxu0 0.0
        %1533 = vmatpush2.msra.mxu0 0.0
        %1534 = vmatprep.subr.mxu0 0.0
        %1535 = vmatpush2.msra.mxu0 0.0
        %1536 = vmatprep.subr.mxu0 0.0
        %1537 = vmatpush2.msra.mxu0 0.0
        %1538 = vmatprep.subr.mxu0 0.0
        %1539 = vmatpush2.msra.mxu0 0.0
        %1540 = vmatprep.subr.mxu0 0.0
        %1541 = vmatpush2.msra.mxu0 0.0
        %1542 = vmatprep.subr.mxu0 0.0
        %1543 = vmatpush2.msra.mxu0 0.0
        %1544 = vmatprep.mubr.f32.mxu0 0.0
        %1545 = vmatmul.mubr.f32.gmra.mxu0 %v874
        %v1546 = vpop.f32.mrf.mxu0
        %v1547 = vadd.f32 0.0, %v1546
        %v1548 = vpop.f32.mrf.mxu0
        %1549 = vmatprep.mubr.f32.mxu0 0.0
        %1550 = vmatmul.mubr.f32.gmra.mxu0 %v877
        %v1551 = vpop.f32.mrf.mxu0
        %v1552 = vadd.f32 0.0, %v1551
        %v1553 = vpop.f32.mrf.mxu0
        %1554 = vmatprep.mubr.f32.mxu0 0.0
        %1555 = vmatmul.mubr.f32.gmra.mxu0 %v880
        %v1556 = vpop.f32.mrf.mxu0
        %v1557 = vadd.f32 0.0, %v1556
        %v1558 = vpop.f32.mrf.mxu0
        %1559 = vmatprep.mubr.f32.mxu0 0.0
        %1560 = vmatmul.mubr.f32.gmra.mxu0 %v883
        %v1561 = vpop.f32.mrf.mxu0
        %v1562 = vadd.f32 0.0, %v1561
        %v1563 = vpop.f32.mrf.mxu0
        %1564 = vdwg.mxu0
        %vm1565 = vcmask 261120
        %1566 = vst.msk [vmem:[%s257] sm:$0xff] %vm1565, %v952
        %1567 = vst.msk [vmem:[%s257 + $0x8] sm:$0xff] %vm1565, %v957
        %1568 = vst.msk [vmem:[%s257 + $0x10] sm:$0xff] %vm1565, %v962
        %1569 = vst.msk [vmem:[%s257 + $0x18] sm:$0xff] %vm1565, %v967
        %1570 = vst.msk [vmem:[%s257 + $0x20] sm:$0xff] %vm1565, %v1037
        %1571 = vst.msk [vmem:[%s257 + $0x28] sm:$0xff] %vm1565, %v1042
        %1572 = vst.msk [vmem:[%s257 + $0x30] sm:$0xff] %vm1565, %v1047
        %1573 = vst.msk [vmem:[%s257 + $0x38] sm:$0xff] %vm1565, %v1052
        %1574 = vst.msk [vmem:[%s257 + $0x40] sm:$0xff] %vm1565, %v1122
        %1575 = vst.msk [vmem:[%s257 + $0x48] sm:$0xff] %vm1565, %v1127
        %1576 = vst.msk [vmem:[%s257 + $0x50] sm:$0xff] %vm1565, %v1132
        %1577 = vst.msk [vmem:[%s257 + $0x58] sm:$0xff] %vm1565, %v1137
        %1578 = vst.msk [vmem:[%s257 + $0x60] sm:$0xff] %vm1565, %v1207
        %1579 = vst.msk [vmem:[%s257 + $0x68] sm:$0xff] %vm1565, %v1212
        %1580 = vst.msk [vmem:[%s257 + $0x70] sm:$0xff] %vm1565, %v1217
        %1581 = vst.msk [vmem:[%s257 + $0x78] sm:$0xff] %vm1565, %v1222
        %1582 = vst.msk [vmem:[%s257 + $0x80] sm:$0xff] %vm1565, %v1292
        %1583 = vst.msk [vmem:[%s257 + $0x88] sm:$0xff] %vm1565, %v1297
        %1584 = vst.msk [vmem:[%s257 + $0x90] sm:$0xff] %vm1565, %v1302
        %1585 = vst.msk [vmem:[%s257 + $0x98] sm:$0xff] %vm1565, %v1307
        %1586 = vst.msk [vmem:[%s257 + $0xa0] sm:$0xff] %vm1565, %v1377
        %1587 = vst.msk [vmem:[%s257 + $0xa8] sm:$0xff] %vm1565, %v1382
        %1588 = vst.msk [vmem:[%s257 + $0xb0] sm:$0xff] %vm1565, %v1387
        %1589 = vst.msk [vmem:[%s257 + $0xb8] sm:$0xff] %vm1565, %v1392
        %1590 = vst.msk [vmem:[%s257 + $0xc0] sm:$0xff] %vm1565, %v1462
        %1591 = vst.msk [vmem:[%s257 + $0xc8] sm:$0xff] %vm1565, %v1467
        %1592 = vst.msk [vmem:[%s257 + $0xd0] sm:$0xff] %vm1565, %v1472
        %1593 = vst.msk [vmem:[%s257 + $0xd8] sm:$0xff] %vm1565, %v1477
        %1594 = vst.msk [vmem:[%s257 + $0xe0] sm:$0xff] %vm1565, %v1547
        %1595 = vst.msk [vmem:[%s257 + $0xe8] sm:$0xff] %vm1565, %v1552
        %1596 = vst.msk [vmem:[%s257 + $0xf0] sm:$0xff] %vm1565, %v1557
        %1597 = vst.msk [vmem:[%s257 + $0xf8] sm:$0xff] %vm1565, %v1562
        %s1598 = sand.u32 %s161, 1
        %s1599 = scalar_lea.sflag [#allocation3], %s1598
        %s1600 = sand.u32 %s161, 1
        %s1601 = smul.addr %s1600, 256
        %s1602 = scalar_lea.vmem [#allocation2], %s1601
        // Predicated region
        $region41: #{tpu_custom_call.1} parent=39 // pred_check
          %p1603 = pneg %p171
        $region42: #{tpu_custom_call.1} parent=39 // pred_check_branch
          %1605 = sbr.rel (%p1603) target = $region44
        $region43: #{tpu_custom_call.1} parent=39 // pred_region
          %s1606 = smul.u32 8, %s24
          %s1608 = ssub.s32 4096, 4096
          %1609 = vsyncadd %s1599, %s1608
          %s1610 = smul.addr %s1606, 4
          %s1611 = smul.addr %s23, 64
          %s1612 = sadd.s32 %s1610, %s1611
          %s1613 = smul.addr %s1612, 128
          %s1614 = scalar_lea.hbm %s5, %s1613
          %s1615 = sshll.u32 %s1602, 4
          %s1616 = int_to_ptr.vmem [resolvable:$true] %s1615
          %1621 = dma.vmem_to_hbm [thread:$0]  %s1616, 4096, %s1614, %s1599, 128, 128, 8
        $region44: #{tpu_custom_call.1} parent=39 // pred_fallthru
          _
      $region40: #{tpu_custom_call.1} parent=5 // pred_fallthru
        _
      %p1622 = scmp.le.s32.totalorder 2, %s14
      // Predicated region
      $region45: #{tpu_custom_call.1} parent=5 // pred_check
        %p1623 = pneg %p1622
      $region46: #{tpu_custom_call.1} parent=5 // pred_check_branch
        %1625 = sbr.rel (%p1623) target = $region48
      $region47: #{tpu_custom_call.1} parent=5 // pred_region
        %s1626 = ssub.s32 %s14, 2
        // Predicated region
        $region49: #{tpu_custom_call.1} parent=47 // pred_check
          %p1627 = pneg %p177
        $region50: #{tpu_custom_call.1} parent=47 // pred_check_branch
          %1629 = sbr.rel (%p1627) target = $region52
        $region51: #{tpu_custom_call.1} parent=47 // pred_region
          %s1630 = sand.u32 %s162, 1
          %s1631 = scalar_lea.sflag [#allocation3], %s1630
          %s1632 = sand.u32 %s162, 1
          %s1633 = smul.addr %s1632, 256
          %s1634 = scalar_lea.vmem [#allocation2], %s1633
          %1635 = dma.done %s1631, 4096
        $region52: #{tpu_custom_call.1} parent=47 // pred_fallthru
          _
      $region48: #{tpu_custom_call.1} parent=5 // pred_fallthru
        _
    $region6: #{tpu_custom_call.1} parent=1 // loop_footer
      %s18 = sadd.s32 1, %s14
    $region7: #{tpu_custom_call.1} parent=1 // loop_footer_branch
      %13 = sbr.rel target = $region3
    $region8: #{tpu_custom_call.1} parent=1 // loop_exit
      _
    %1636 = vsyncpa [#allocation3], 1
    %s1637 = scalar_lea.sflag [#allocation3], 1
    %1638 = vsyncpa %s1637, 1

</llo_original>
